<compile_context>
chip_gen: v5e
topology: v5e:2x2
jax: 0.10.0
libtpu: 0.0.40
codegen_flags: <defaults>
</compile_context>

<pallas_src>
import jax
import jax.numpy as jnp
from jax import lax
from jax.experimental import pallas as pl
from jax.experimental.pallas import tpu as pltpu
import numpy as np


def branch_dec_rnn_kernel(tgt_ref, init_row_ref, hidden_ref, cell_ref,
                          w_in_ref, b_in_ref, w_hh0_ref, w_ih1_ref, w_hh1_ref,
                          b1_ref, w_out_ref, b_out_ref,
                          out_ref, gx_scr):
    TB = tgt_ref.shape[0]            # number of decode steps (T - 1)
    BB = tgt_ref.shape[1]            # per-program batch block (multiple of 8)
    O = tgt_ref.shape[2]
    H = hidden_ref.shape[2]
    G = 4 * H
    OP = w_out_ref.shape[1]          # lane-dense output width (128)

    # outputs[0] = init = target[0]  (pre-padded lane-dense in the wrapper).
    out_ref[0] = init_row_ref[...]

    # ---- (1) bulk input-side gate pre-activations for ALL teacher-forced ----
    # inputs target[0..T-2]: one batched MXU matmul, off the serial chain.
    x_all = tgt_ref[...].reshape(TB * BB, O)
    gx_scr[...] = (jnp.dot(x_all, w_in_ref[...],
                           preferred_element_type=jnp.float32)
                   + b_in_ref[...])

    # ---- (2) hoist weights (bf16 for recurrent dots) / pre-broadcast biases --
    w_hh0 = w_hh0_ref[...]                                # (H, 4H) bf16
    w_ih1 = w_ih1_ref[...]                                # (H, 4H) bf16
    w_hh1 = w_hh1_ref[...]                                # (H, 4H) bf16
    w_out = w_out_ref[...]                                # (H, OP) f32
    b1 = jnp.broadcast_to(b1_ref[...], (BB, G))           # broadcast once
    b_out = jnp.broadcast_to(b_out_ref[...], (BB, OP))

    def gates_to_hc(g_pre, c_prev):
        # Gate columns are [i|f|o|g]; the i/f/o pre-activations were pre-scaled
        # by 0.5 in the wrapper, so sigmoid(x) = 0.5*tanh(x/2) + 0.5 lets ONE
        # tanh push over the full 4H-lane vector evaluate all four gates
        # (instead of 3 narrow sigmoids + 1 tanh).
        t_all = jnp.tanh(g_pre)
        s = t_all * 0.5 + 0.5
        i = s[:, 0 * H:1 * H]
        f = s[:, 1 * H:2 * H]
        o = s[:, 2 * H:3 * H]
        gg = t_all[:, 3 * H:4 * H]
        c_new = f * c_prev + i * gg
        h_new = o * jnp.tanh(c_new)
        return h_new, c_new

    def step(t, carry):
        h0, c0, h1, c1 = carry
        # Layer-1 recurrent dot depends only on the previous step's h1, so it
        # is independent of this step's layer-0 chain and can be overlapped.
        g1_h = jnp.dot(h1.astype(jnp.bfloat16), w_hh1,
                       preferred_element_type=jnp.float32)
        # Layer 0: only the recurrent dot sits on the serial critical path.
        row = pl.multiple_of((t - 1) * BB, BB)
        g0 = gx_scr[pl.ds(row, BB), :] + jnp.dot(
            h0.astype(jnp.bfloat16), w_hh0, preferred_element_type=jnp.float32)
        h0n, c0n = gates_to_hc(g0, c0)
        # Layer 1: two separate dots (no per-step concat / lane relayout).
        g1 = g1_h + b1 + jnp.dot(h0n.astype(jnp.bfloat16), w_ih1,
                                 preferred_element_type=jnp.float32)
        h1n, c1n = gates_to_hc(g1, c1)
        # Per-step output projection: off the recurrence's critical path,
        # fills MXU slack; lane-dense (OP=128) unmasked store.
        out_ref[t] = (jnp.dot(h1n, w_out, preferred_element_type=jnp.float32)
                      + b_out)
        return (h0n, c0n, h1n, c1n)

    init = (hidden_ref[0], cell_ref[0], hidden_ref[1], cell_ref[1])
    # ---- (3) serial recurrence: full unroll only while T stays small --------
    lax.fori_loop(1, TB + 1, step, init,
                  unroll=True if TB <= 8 else 8)


def _reorder_gate_cols(w):
    """Gate columns [i|f|g|o] -> [i|f|o|g], pre-scaling sigmoid gates by 0.5.

    The 0.5 pre-scale on i/f/o lets the kernel evaluate all four gates with a
    single tanh: sigmoid(x) = 0.5 * tanh(x/2) + 0.5.
    """
    i, f, g, o = jnp.split(w, 4, axis=-1)
    return jnp.concatenate([0.5 * i, 0.5 * f, 0.5 * o, g], axis=-1)


def branch_dec_rnn_forward(target, hidden, cell, params, *, batch_block=None):
    """target: (T, B, O); hidden/cell: (2, B, H). Returns (T, B, O) float32."""
    T, B, O = target.shape
    L, _, H = hidden.shape
    assert L == 2
    assert T >= 2, "kernel path expects at least one decode step"

    f32, bf16 = jnp.float32, jnp.bfloat16
    OP = 128                        # lane-dense output width (sliced back below)
    G = 4 * H

    # Per-program batch block: a "parallel" grid over batch lets both v7x
    # TensorCores run independent slices of the recurrence (grid=(1,) here).
    if batch_block is None:
        BB = min(((B + 7) // 8) * 8, 128)
    else:
        BB = max(8, (int(batch_block) // 8) * 8)
    BP = ((B + BB - 1) // BB) * BB
    pad_b = BP - B
    n_prog = BP // BB

    target_p = jnp.pad(target.astype(f32), ((0, 0), (0, pad_b), (0, 0)))
    hidden_p = jnp.pad(hidden.astype(f32), ((0, 0), (0, pad_b), (0, 0)))
    cell_p = jnp.pad(cell.astype(f32), ((0, 0), (0, pad_b), (0, 0)))

    tgt_in = target_p[:T - 1]                                # decoder inputs
    init_row = jnp.pad(target_p[0], ((0, 0), (0, OP - O)))   # (BP, OP)

    # Fold coordinate2emb into the layer-0 input projection (teaching = 1.0:
    # every decoder input target[t-1] is known up front); reorder/pre-scale
    # gate columns; recurrent weights in bf16 (f32 accumulation in-kernel).
    w_in = _reorder_gate_cols(params["w_emb"] @ params["w_ih0"])             # (O, 4H)
    b_in = _reorder_gate_cols(params["b_emb"] @ params["w_ih0"] + params["b0"])
    w_hh0 = _reorder_gate_cols(params["w_hh0"]).astype(bf16)                 # (H, 4H)
    w_ih1 = _reorder_gate_cols(params["w_ih1"]).astype(bf16)                 # (H, 4H)
    w_hh1 = _reorder_gate_cols(params["w_hh1"]).astype(bf16)                 # (H, 4H)
    b1 = _reorder_gate_cols(params["b1"])                                    # (1, 4H)
    w_out = jnp.pad(params["w_out"], ((0, 0), (0, OP - O)))                  # (H, OP)
    b_out = jnp.pad(params["b_out"], ((0, 0), (0, OP - O)))                  # (1, OP)

    in_specs = [
        pl.BlockSpec((T - 1, BB, O), lambda b: (0, b, 0)),   # target[0..T-2]
        pl.BlockSpec((BB, OP), lambda b: (b, 0)),            # init row
        pl.BlockSpec((2, BB, H), lambda b: (0, b, 0)),       # hidden
        pl.BlockSpec((2, BB, H), lambda b: (0, b, 0)),       # cell
        pl.BlockSpec((O, G), lambda b: (0, 0)),              # w_in
        pl.BlockSpec((1, G), lambda b: (0, 0)),              # b_in
        pl.BlockSpec((H, G), lambda b: (0, 0)),              # w_hh0 (bf16)
        pl.BlockSpec((H, G), lambda b: (0, 0)),              # w_ih1 (bf16)
        pl.BlockSpec((H, G), lambda b: (0, 0)),              # w_hh1 (bf16)
        pl.BlockSpec((1, G), lambda b: (0, 0)),              # b1
        pl.BlockSpec((H, OP), lambda b: (0, 0)),             # w_out
        pl.BlockSpec((1, OP), lambda b: (0, 0)),             # b_out
    ]
    out_spec = pl.BlockSpec((T, BB, OP), lambda b: (0, b, 0))

    # Explicit VMEM budget (double-buffered grid blocks + weights + scratch),
    # clamped to stay within every generation's physical VMEM (v7x: 64 MiB).
    blk_bytes = 4 * ((T - 1) * BB * O + BB * OP + 4 * BB * H
                     + T * BB * OP + (T - 1) * BB * G)
    w_bytes = 4 * (O * G + 2 * G + H * OP + OP) + 2 * (3 * H * G)
    vmem_limit = int(min(64 << 20,
                         max(16 << 20, 2 * (blk_bytes + w_bytes) + (4 << 20))))

    out = pl.pallas_call(
        branch_dec_rnn_kernel,
        out_shape=jax.ShapeDtypeStruct((T, BP, OP), f32),
        grid_spec=pltpu.PrefetchScalarGridSpec(
            num_scalar_prefetch=0,
            grid=(n_prog,),
            in_specs=in_specs,
            out_specs=out_spec,
            scratch_shapes=[pltpu.VMEM(((T - 1) * BB, G), f32)],  # gate preacts
        ),
        compiler_params=pltpu.CompilerParams(
            dimension_semantics=("parallel",),
            vmem_limit_bytes=vmem_limit),
    )(tgt_in, init_row, hidden_p, cell_p,
      w_in, b_in, w_hh0, w_ih1, w_hh1, b1, w_out, b_out)

    return out[:, :B, :O]


def init_params(key, output_dim, embedding_dim, hidden_dim):
    """Deterministic parameter init mimicking PyTorch default shapes/bounds."""
    ks = list(jax.random.split(key, 16))

    def u(k, shape, fan_in):
        bound = 1.0 / np.sqrt(fan_in)
        return jax.random.uniform(k, shape, jnp.float32, -bound, bound)

    H, E, O = hidden_dim, embedding_dim, output_dim
    params = {
        # coordinate2emb: Linear(O, E)  (stored as (O, E) for x @ W)
        "w_emb": u(ks[0], (O, E), O),
        "b_emb": u(ks[1], (1, E), O),
        # LSTM layer 0: input E  (gate column order i,f,g,o)
        "w_ih0": u(ks[2], (E, 4 * H), H),
        "w_hh0": u(ks[3], (H, 4 * H), H),
        "b0":    u(ks[4], (1, 4 * H), H) + u(ks[5], (1, 4 * H), H),  # b_ih + b_hh
        # LSTM layer 1: input H
        "w_ih1": u(ks[6], (H, 4 * H), H),
        "w_hh1": u(ks[7], (H, 4 * H), H),
        "b1":    u(ks[8], (1, 4 * H), H) + u(ks[9], (1, 4 * H), H),
        # hid2coordinate: Linear(H, O)
        "w_out": u(ks[10], (H, O), H),
        "b_out": u(ks[11], (1, O), H),
    }
    return params


def reference_forward(target, hidden, cell, params):
    """Pure-JAX f32 reference of the same semantics (teaching=1.0, eval mode)."""
    T, B, O = target.shape
    H = hidden.shape[-1]
    outs = [target[0]]
    h0, h1 = hidden[0], hidden[1]
    c0, c1 = cell[0], cell[1]

    def cell_fn(x, h, c, w_ih, w_hh, b):
        g = x @ w_ih + h @ w_hh + b
        i = jax.nn.sigmoid(g[:, :H])
        f = jax.nn.sigmoid(g[:, H:2 * H])
        gg = jnp.tanh(g[:, 2 * H:3 * H])
        o = jax.nn.sigmoid(g[:, 3 * H:])
        c_new = f * c + i * gg
        return o * jnp.tanh(c_new), c_new

    for t in range(1, T):
        cur = target[t - 1]
        emb = cur @ params["w_emb"] + params["b_emb"]
        h0, c0 = cell_fn(emb, h0, c0, params["w_ih0"], params["w_hh0"], params["b0"])
        h1, c1 = cell_fn(h0, h1, c1, params["w_ih1"], params["w_hh1"], params["b1"])
        outs.append(h1 @ params["w_out"] + params["b_out"])
    return jnp.stack(outs, axis=0)


if __name__ == "__main__":
    # Small shapes consistent with the module.
    output_dim, embedding_dim, hidden_dim = 8, 16, 32
    n_layers, batch, target_len = 2, 4, 6

    key = jax.random.PRNGKey(0)
    k_par, k_tgt, k_h, k_c = jax.random.split(key, 4)

    params = init_params(k_par, output_dim, embedding_dim, hidden_dim)
    target = jax.random.normal(k_tgt, (target_len, batch, output_dim), jnp.float32)
    hidden = jax.random.normal(k_h, (n_layers, batch, hidden_dim), jnp.float32)
    cell = jax.random.normal(k_c, (n_layers, batch, hidden_dim), jnp.float32)

    out = branch_dec_rnn_forward(target, hidden, cell, params)
    out = jax.block_until_ready(out)

    ref = reference_forward(target, hidden, cell, params)
    # Recurrent matmul operands are bf16 (f32 accumulation, f32 state, f32
    # head/tail projections), so validate against the pure-f32 reference with
    # a correspondingly relaxed tolerance.
    np.testing.assert_allclose(np.asarray(out), np.asarray(ref), rtol=2e-2, atol=2e-2)

    print("KERNEL_OK")
</pallas_src>

<mosaic_0001>
module attributes {stable_mosaic.version = 11 : i64} {
  func.func @branch_dec_rnn_kernel(%arg0: i32, %arg1: memref<5x8x8xf32, #tpu.memory_space<vmem>>, %arg2: memref<8x128xf32, #tpu.memory_space<vmem>>, %arg3: memref<2x8x32xf32, #tpu.memory_space<vmem>>, %arg4: memref<2x8x32xf32, #tpu.memory_space<vmem>>, %arg5: memref<8x128xf32, #tpu.memory_space<vmem>>, %arg6: memref<1x128xf32, #tpu.memory_space<vmem>>, %arg7: memref<32x128xbf16, #tpu.memory_space<vmem>>, %arg8: memref<32x128xbf16, #tpu.memory_space<vmem>>, %arg9: memref<32x128xbf16, #tpu.memory_space<vmem>>, %arg10: memref<1x128xf32, #tpu.memory_space<vmem>>, %arg11: memref<32x128xf32, #tpu.memory_space<vmem>>, %arg12: memref<1x128xf32, #tpu.memory_space<vmem>>, %arg13: memref<6x8x128xf32, #tpu.memory_space<vmem>>, %arg14: memref<40x128xf32, #tpu.memory_space<vmem>>) attributes {dimension_semantics = [#tpu.dimension_semantics<parallel>], iteration_bounds = array<i64: 1>, scalar_prefetch = 0 : i64, scratch_operands = 1 : i64, tpu.core_type = #tpu.core_type<tc>, window_params = [{transform_indices = @transform_0, window_bounds = array<i64: 5, 8, 8>}, {transform_indices = @transform_1, window_bounds = array<i64: 8, 128>}, {transform_indices = @transform_2, window_bounds = array<i64: 2, 8, 32>}, {transform_indices = @transform_3, window_bounds = array<i64: 2, 8, 32>}, {pipeline_mode = #tpu.pipeline_mode<synchronous>, transform_indices = @transform_4, window_bounds = array<i64: 8, 128>}, {pipeline_mode = #tpu.pipeline_mode<synchronous>, transform_indices = @transform_5, window_bounds = array<i64: 1, 128>}, {pipeline_mode = #tpu.pipeline_mode<synchronous>, transform_indices = @transform_6, window_bounds = array<i64: 32, 128>}, {pipeline_mode = #tpu.pipeline_mode<synchronous>, transform_indices = @transform_7, window_bounds = array<i64: 32, 128>}, {pipeline_mode = #tpu.pipeline_mode<synchronous>, transform_indices = @transform_8, window_bounds = array<i64: 32, 128>}, {pipeline_mode = #tpu.pipeline_mode<synchronous>, transform_indices = @transform_9, window_bounds = array<i64: 1, 128>}, {pipeline_mode = #tpu.pipeline_mode<synchronous>, transform_indices = @transform_10, window_bounds = array<i64: 32, 128>}, {pipeline_mode = #tpu.pipeline_mode<synchronous>, transform_indices = @transform_11, window_bounds = array<i64: 1, 128>}, {transform_indices = @transform_12, window_bounds = array<i64: 6, 8, 128>}]} {
    %c0 = arith.constant 0 : index
    %c0_0 = arith.constant 0 : index
    %0 = vector.load %arg2[%c0, %c0_0] : memref<8x128xf32, #tpu.memory_space<vmem>>, vector<8x128xf32>
    %c0_1 = arith.constant 0 : index
    %c0_2 = arith.constant 0 : index
    %c0_3 = arith.constant 0 : index
    %1 = vector.load %arg13[%c0_1, %c0_2, %c0_3] : memref<6x8x128xf32, #tpu.memory_space<vmem>>, vector<1x8x128xf32>
    %2 = vector.shape_cast %1 : vector<1x8x128xf32> to vector<8x128xf32>
    %3 = vector.shape_cast %0 : vector<8x128xf32> to vector<1x8x128xf32>
    tpu.vector_store %arg13[%c0_1, %c0_2, %c0_3], %3 {strides = array<i32>} : memref<6x8x128xf32, #tpu.memory_space<vmem>>, vector<1x8x128xf32>,
    %c0_4 = arith.constant 0 : index
    %c0_5 = arith.constant 0 : index
    %c0_6 = arith.constant 0 : index
    %4 = vector.load %arg1[%c0_4, %c0_5, %c0_6] : memref<5x8x8xf32, #tpu.memory_space<vmem>>, vector<5x8x8xf32>
    %5 = vector.shape_cast %4 : vector<5x8x8xf32> to vector<40x8xf32>
    %c0_7 = arith.constant 0 : index
    %c0_8 = arith.constant 0 : index
    %6 = vector.load %arg5[%c0_7, %c0_8] : memref<8x128xf32, #tpu.memory_space<vmem>>, vector<8x128xf32>
    %cst = arith.constant dense<0.000000e+00> : vector<40x128xf32>
    %7 = tpu.matmul %5, %6, %cst {dimension_numbers = #tpu.dot_dimension_numbers<[1], [0], [0], [1], [0, 0, 1, 1], [], []>} : vector<40x8xf32>, vector<8x128xf32>, vector<40x128xf32> -> vector<40x128xf32>
    %c0_9 = arith.constant 0 : index
    %c0_10 = arith.constant 0 : index
    %8 = vector.load %arg6[%c0_9, %c0_10] : memref<1x128xf32, #tpu.memory_space<vmem>>, vector<1x128xf32>
    %9 = vector.broadcast %8 : vector<1x128xf32> to vector<40x128xf32>
    %10 = arith.addf %7, %9 : vector<40x128xf32>
    %c0_11 = arith.constant 0 : index
    %c0_12 = arith.constant 0 : index
    %11 = vector.load %arg14[%c0_11, %c0_12] : memref<40x128xf32, #tpu.memory_space<vmem>>, vector<40x128xf32>
    tpu.vector_store %arg14[%c0_11, %c0_12], %10 {strides = array<i32>} : memref<40x128xf32, #tpu.memory_space<vmem>>, vector<40x128xf32>,
    %c0_13 = arith.constant 0 : index
    %c0_14 = arith.constant 0 : index
    %12 = vector.load %arg7[%c0_13, %c0_14] : memref<32x128xbf16, #tpu.memory_space<vmem>>, vector<32x128xbf16>
    %c0_15 = arith.constant 0 : index
    %c0_16 = arith.constant 0 : index
    %13 = vector.load %arg8[%c0_15, %c0_16] : memref<32x128xbf16, #tpu.memory_space<vmem>>, vector<32x128xbf16>
    %c0_17 = arith.constant 0 : index
    %c0_18 = arith.constant 0 : index
    %14 = vector.load %arg9[%c0_17, %c0_18] : memref<32x128xbf16, #tpu.memory_space<vmem>>, vector<32x128xbf16>
    %c0_19 = arith.constant 0 : index
    %c0_20 = arith.constant 0 : index
    %15 = vector.load %arg11[%c0_19, %c0_20] : memref<32x128xf32, #tpu.memory_space<vmem>>, vector<32x128xf32>
    %c0_21 = arith.constant 0 : index
    %c0_22 = arith.constant 0 : index
    %16 = vector.load %arg10[%c0_21, %c0_22] : memref<1x128xf32, #tpu.memory_space<vmem>>, vector<1x128xf32>
    %17 = vector.shape_cast %16 : vector<1x128xf32> to vector<1x128xf32>
    %18 = vector.broadcast %17 : vector<1x128xf32> to vector<8x128xf32>
    %c0_23 = arith.constant 0 : index
    %c0_24 = arith.constant 0 : index
    %19 = vector.load %arg12[%c0_23, %c0_24] : memref<1x128xf32, #tpu.memory_space<vmem>>, vector<1x128xf32>
    %20 = vector.shape_cast %19 : vector<1x128xf32> to vector<1x128xf32>
    %21 = vector.broadcast %20 : vector<1x128xf32> to vector<8x128xf32>
    %c0_25 = arith.constant 0 : index
    %c0_26 = arith.constant 0 : index
    %c0_27 = arith.constant 0 : index
    %22 = vector.load %arg3[%c0_25, %c0_26, %c0_27] : memref<2x8x32xf32, #tpu.memory_space<vmem>>, vector<1x8x32xf32>
    %23 = vector.shape_cast %22 : vector<1x8x32xf32> to vector<8x32xf32>
    %c0_28 = arith.constant 0 : index
    %c0_29 = arith.constant 0 : index
    %c0_30 = arith.constant 0 : index
    %24 = vector.load %arg4[%c0_28, %c0_29, %c0_30] : memref<2x8x32xf32, #tpu.memory_space<vmem>>, vector<1x8x32xf32>
    %25 = vector.shape_cast %24 : vector<1x8x32xf32> to vector<8x32xf32>
    %c1 = arith.constant 1 : index
    %c0_31 = arith.constant 0 : index
    %c0_32 = arith.constant 0 : index
    %26 = vector.load %arg3[%c1, %c0_31, %c0_32] : memref<2x8x32xf32, #tpu.memory_space<vmem>>, vector<1x8x32xf32>
    %27 = vector.shape_cast %26 : vector<1x8x32xf32> to vector<8x32xf32>
    %c1_33 = arith.constant 1 : index
    %c0_34 = arith.constant 0 : index
    %c0_35 = arith.constant 0 : index
    %28 = vector.load %arg4[%c1_33, %c0_34, %c0_35] : memref<2x8x32xf32, #tpu.memory_space<vmem>>, vector<1x8x32xf32>
    %29 = vector.shape_cast %28 : vector<1x8x32xf32> to vector<8x32xf32>
    %c1_i32 = arith.constant 1 : i32
    %30 = arith.truncf %27 : vector<8x32xf32> to vector<8x32xbf16>
    %cst_36 = arith.constant dense<0.000000e+00> : vector<8x128xf32>
    %31 = tpu.matmul %30, %14, %cst_36 {dimension_numbers = #tpu.dot_dimension_numbers<[1], [0], [0], [1], [0, 0, 1, 1], [], []>} : vector<8x32xbf16>, vector<32x128xbf16>, vector<8x128xf32> -> vector<8x128xf32>
    %c1_i32_37 = arith.constant 1 : i32
    %32 = arith.subi %c1_i32, %c1_i32_37 : i32
    %c8_i32 = arith.constant 8 : i32
    %33 = arith.muli %32, %c8_i32 : i32
    %34 = tpu.assume_multiple %33, 8 : i32
    %35 = arith.index_cast %34 : i32 to index
    %c0_38 = arith.constant 0 : index
    %36 = vector.load %arg14[%35, %c0_38] : memref<40x128xf32, #tpu.memory_space<vmem>>, vector<8x128xf32>
    %37 = arith.truncf %23 : vector<8x32xf32> to vector<8x32xbf16>
    %cst_39 = arith.constant dense<0.000000e+00> : vector<8x128xf32>
    %38 = tpu.matmul %37, %12, %cst_39 {dimension_numbers = #tpu.dot_dimension_numbers<[1], [0], [0], [1], [0, 0, 1, 1], [], []>} : vector<8x32xbf16>, vector<32x128xbf16>, vector<8x128xf32> -> vector<8x128xf32>
    %39 = arith.addf %36, %38 : vector<8x128xf32>
    %40 = math.tanh %39 : vector<8x128xf32>
    %cst_40 = arith.constant 5.000000e-01 : f32
    %41 = vector.broadcast %cst_40 : f32 to vector<8x128xf32>
    %42 = arith.mulf %40, %41 : vector<8x128xf32>
    %cst_41 = arith.constant 5.000000e-01 : f32
    %43 = vector.broadcast %cst_41 : f32 to vector<8x128xf32>
    %44 = arith.addf %42, %43 : vector<8x128xf32>
    %45 = vector.extract_strided_slice %44 {offsets = [0, 0], sizes = [8, 32], strides = [1, 1]} : vector<8x128xf32> to vector<8x32xf32>
    %46 = vector.extract_strided_slice %44 {offsets = [0, 32], sizes = [8, 32], strides = [1, 1]} : vector<8x128xf32> to vector<8x32xf32>
    %47 = vector.extract_strided_slice %44 {offsets = [0, 64], sizes = [8, 32], strides = [1, 1]} : vector<8x128xf32> to vector<8x32xf32>
    %48 = vector.extract_strided_slice %40 {offsets = [0, 96], sizes = [8, 32], strides = [1, 1]} : vector<8x128xf32> to vector<8x32xf32>
    %49 = arith.mulf %46, %25 : vector<8x32xf32>
    %50 = arith.mulf %45, %48 : vector<8x32xf32>
    %51 = arith.addf %49, %50 : vector<8x32xf32>
    %52 = math.tanh %51 : vector<8x32xf32>
    %53 = arith.mulf %47, %52 : vector<8x32xf32>
    %54 = arith.addf %31, %18 : vector<8x128xf32>
    %55 = arith.truncf %53 : vector<8x32xf32> to vector<8x32xbf16>
    %cst_42 = arith.constant dense<0.000000e+00> : vector<8x128xf32>
    %56 = tpu.matmul %55, %13, %cst_42 {dimension_numbers = #tpu.dot_dimension_numbers<[1], [0], [0], [1], [0, 0, 1, 1], [], []>} : vector<8x32xbf16>, vector<32x128xbf16>, vector<8x128xf32> -> vector<8x128xf32>
    %57 = arith.addf %54, %56 : vector<8x128xf32>
    %58 = math.tanh %57 : vector<8x128xf32>
    %cst_43 = arith.constant 5.000000e-01 : f32
    %59 = vector.broadcast %cst_43 : f32 to vector<8x128xf32>
    %60 = arith.mulf %58, %59 : vector<8x128xf32>
    %cst_44 = arith.constant 5.000000e-01 : f32
    %61 = vector.broadcast %cst_44 : f32 to vector<8x128xf32>
    %62 = arith.addf %60, %61 : vector<8x128xf32>
    %63 = vector.extract_strided_slice %62 {offsets = [0, 0], sizes = [8, 32], strides = [1, 1]} : vector<8x128xf32> to vector<8x32xf32>
    %64 = vector.extract_strided_slice %62 {offsets = [0, 32], sizes = [8, 32], strides = [1, 1]} : vector<8x128xf32> to vector<8x32xf32>
    %65 = vector.extract_strided_slice %62 {offsets = [0, 64], sizes = [8, 32], strides = [1, 1]} : vector<8x128xf32> to vector<8x32xf32>
    %66 = vector.extract_strided_slice %58 {offsets = [0, 96], sizes = [8, 32], strides = [1, 1]} : vector<8x128xf32> to vector<8x32xf32>
    %67 = arith.mulf %64, %29 : vector<8x32xf32>
    %68 = arith.mulf %63, %66 : vector<8x32xf32>
    %69 = arith.addf %67, %68 : vector<8x32xf32>
    %70 = math.tanh %69 : vector<8x32xf32>
    %71 = arith.mulf %65, %70 : vector<8x32xf32>
    %cst_45 = arith.constant dense<0.000000e+00> : vector<8x128xf32>
    %72 = tpu.matmul %71, %15, %cst_45 {dimension_numbers = #tpu.dot_dimension_numbers<[1], [0], [0], [1], [0, 0, 1, 1], [], []>} : vector<8x32xf32>, vector<32x128xf32>, vector<8x128xf32> -> vector<8x128xf32>
    %73 = arith.addf %72, %21 : vector<8x128xf32>
    %74 = arith.index_cast %c1_i32 : i32 to index
    %c0_46 = arith.constant 0 : index
    %c0_47 = arith.constant 0 : index
    %75 = vector.load %arg13[%74, %c0_46, %c0_47] : memref<6x8x128xf32, #tpu.memory_space<vmem>>, vector<1x8x128xf32>
    %76 = vector.shape_cast %75 : vector<1x8x128xf32> to vector<8x128xf32>
    %77 = vector.shape_cast %73 : vector<8x128xf32> to vector<1x8x128xf32>
    tpu.vector_store %arg13[%74, %c0_46, %c0_47], %77 {strides = array<i32>} : memref<6x8x128xf32, #tpu.memory_space<vmem>>, vector<1x8x128xf32>,
    %c2_i32 = arith.constant 2 : i32
    %78 = arith.truncf %71 : vector<8x32xf32> to vector<8x32xbf16>
    %cst_48 = arith.constant dense<0.000000e+00> : vector<8x128xf32>
    %79 = tpu.matmul %78, %14, %cst_48 {dimension_numbers = #tpu.dot_dimension_numbers<[1], [0], [0], [1], [0, 0, 1, 1], [], []>} : vector<8x32xbf16>, vector<32x128xbf16>, vector<8x128xf32> -> vector<8x128xf32>
    %c1_i32_49 = arith.constant 1 : i32
    %80 = arith.subi %c2_i32, %c1_i32_49 : i32
    %c8_i32_50 = arith.constant 8 : i32
    %81 = arith.muli %80, %c8_i32_50 : i32
    %82 = tpu.assume_multiple %81, 8 : i32
    %83 = arith.index_cast %82 : i32 to index
    %c0_51 = arith.constant 0 : index
    %84 = vector.load %arg14[%83, %c0_51] : memref<40x128xf32, #tpu.memory_space<vmem>>, vector<8x128xf32>
    %85 = arith.truncf %53 : vector<8x32xf32> to vector<8x32xbf16>
    %cst_52 = arith.constant dense<0.000000e+00> : vector<8x128xf32>
    %86 = tpu.matmul %85, %12, %cst_52 {dimension_numbers = #tpu.dot_dimension_numbers<[1], [0], [0], [1], [0, 0, 1, 1], [], []>} : vector<8x32xbf16>, vector<32x128xbf16>, vector<8x128xf32> -> vector<8x128xf32>
    %87 = arith.addf %84, %86 : vector<8x128xf32>
    %88 = math.tanh %87 : vector<8x128xf32>
    %cst_53 = arith.constant 5.000000e-01 : f32
    %89 = vector.broadcast %cst_53 : f32 to vector<8x128xf32>
    %90 = arith.mulf %88, %89 : vector<8x128xf32>
    %cst_54 = arith.constant 5.000000e-01 : f32
    %91 = vector.broadcast %cst_54 : f32 to vector<8x128xf32>
    %92 = arith.addf %90, %91 : vector<8x128xf32>
    %93 = vector.extract_strided_slice %92 {offsets = [0, 0], sizes = [8, 32], strides = [1, 1]} : vector<8x128xf32> to vector<8x32xf32>
    %94 = vector.extract_strided_slice %92 {offsets = [0, 32], sizes = [8, 32], strides = [1, 1]} : vector<8x128xf32> to vector<8x32xf32>
    %95 = vector.extract_strided_slice %92 {offsets = [0, 64], sizes = [8, 32], strides = [1, 1]} : vector<8x128xf32> to vector<8x32xf32>
    %96 = vector.extract_strided_slice %88 {offsets = [0, 96], sizes = [8, 32], strides = [1, 1]} : vector<8x128xf32> to vector<8x32xf32>
    %97 = arith.mulf %94, %51 : vector<8x32xf32>
    %98 = arith.mulf %93, %96 : vector<8x32xf32>
    %99 = arith.addf %97, %98 : vector<8x32xf32>
    %100 = math.tanh %99 : vector<8x32xf32>
    %101 = arith.mulf %95, %100 : vector<8x32xf32>
    %102 = arith.addf %79, %18 : vector<8x128xf32>
    %103 = arith.truncf %101 : vector<8x32xf32> to vector<8x32xbf16>
    %cst_55 = arith.constant dense<0.000000e+00> : vector<8x128xf32>
    %104 = tpu.matmul %103, %13, %cst_55 {dimension_numbers = #tpu.dot_dimension_numbers<[1], [0], [0], [1], [0, 0, 1, 1], [], []>} : vector<8x32xbf16>, vector<32x128xbf16>, vector<8x128xf32> -> vector<8x128xf32>
    %105 = arith.addf %102, %104 : vector<8x128xf32>
    %106 = math.tanh %105 : vector<8x128xf32>
    %cst_56 = arith.constant 5.000000e-01 : f32
    %107 = vector.broadcast %cst_56 : f32 to vector<8x128xf32>
    %108 = arith.mulf %106, %107 : vector<8x128xf32>
    %cst_57 = arith.constant 5.000000e-01 : f32
    %109 = vector.broadcast %cst_57 : f32 to vector<8x128xf32>
    %110 = arith.addf %108, %109 : vector<8x128xf32>
    %111 = vector.extract_strided_slice %110 {offsets = [0, 0], sizes = [8, 32], strides = [1, 1]} : vector<8x128xf32> to vector<8x32xf32>
    %112 = vector.extract_strided_slice %110 {offsets = [0, 32], sizes = [8, 32], strides = [1, 1]} : vector<8x128xf32> to vector<8x32xf32>
    %113 = vector.extract_strided_slice %110 {offsets = [0, 64], sizes = [8, 32], strides = [1, 1]} : vector<8x128xf32> to vector<8x32xf32>
    %114 = vector.extract_strided_slice %106 {offsets = [0, 96], sizes = [8, 32], strides = [1, 1]} : vector<8x128xf32> to vector<8x32xf32>
    %115 = arith.mulf %112, %69 : vector<8x32xf32>
    %116 = arith.mulf %111, %114 : vector<8x32xf32>
    %117 = arith.addf %115, %116 : vector<8x32xf32>
    %118 = math.tanh %117 : vector<8x32xf32>
    %119 = arith.mulf %113, %118 : vector<8x32xf32>
    %cst_58 = arith.constant dense<0.000000e+00> : vector<8x128xf32>
    %120 = tpu.matmul %119, %15, %cst_58 {dimension_numbers = #tpu.dot_dimension_numbers<[1], [0], [0], [1], [0, 0, 1, 1], [], []>} : vector<8x32xf32>, vector<32x128xf32>, vector<8x128xf32> -> vector<8x128xf32>
    %121 = arith.addf %120, %21 : vector<8x128xf32>
    %122 = arith.index_cast %c2_i32 : i32 to index
    %c0_59 = arith.constant 0 : index
    %c0_60 = arith.constant 0 : index
    %123 = vector.load %arg13[%122, %c0_59, %c0_60] : memref<6x8x128xf32, #tpu.memory_space<vmem>>, vector<1x8x128xf32>
    %124 = vector.shape_cast %123 : vector<1x8x128xf32> to vector<8x128xf32>
    %125 = vector.shape_cast %121 : vector<8x128xf32> to vector<1x8x128xf32>
    tpu.vector_store %arg13[%122, %c0_59, %c0_60], %125 {strides = array<i32>} : memref<6x8x128xf32, #tpu.memory_space<vmem>>, vector<1x8x128xf32>,
    %c3_i32 = arith.constant 3 : i32
    %126 = arith.truncf %119 : vector<8x32xf32> to vector<8x32xbf16>
    %cst_61 = arith.constant dense<0.000000e+00> : vector<8x128xf32>
    %127 = tpu.matmul %126, %14, %cst_61 {dimension_numbers = #tpu.dot_dimension_numbers<[1], [0], [0], [1], [0, 0, 1, 1], [], []>} : vector<8x32xbf16>, vector<32x128xbf16>, vector<8x128xf32> -> vector<8x128xf32>
    %c1_i32_62 = arith.constant 1 : i32
    %128 = arith.subi %c3_i32, %c1_i32_62 : i32
    %c8_i32_63 = arith.constant 8 : i32
    %129 = arith.muli %128, %c8_i32_63 : i32
    %130 = tpu.assume_multiple %129, 8 : i32
    %131 = arith.index_cast %130 : i32 to index
    %c0_64 = arith.constant 0 : index
    %132 = vector.load %arg14[%131, %c0_64] : memref<40x128xf32, #tpu.memory_space<vmem>>, vector<8x128xf32>
    %133 = arith.truncf %101 : vector<8x32xf32> to vector<8x32xbf16>
    %cst_65 = arith.constant dense<0.000000e+00> : vector<8x128xf32>
    %134 = tpu.matmul %133, %12, %cst_65 {dimension_numbers = #tpu.dot_dimension_numbers<[1], [0], [0], [1], [0, 0, 1, 1], [], []>} : vector<8x32xbf16>, vector<32x128xbf16>, vector<8x128xf32> -> vector<8x128xf32>
    %135 = arith.addf %132, %134 : vector<8x128xf32>
    %136 = math.tanh %135 : vector<8x128xf32>
    %cst_66 = arith.constant 5.000000e-01 : f32
    %137 = vector.broadcast %cst_66 : f32 to vector<8x128xf32>
    %138 = arith.mulf %136, %137 : vector<8x128xf32>
    %cst_67 = arith.constant 5.000000e-01 : f32
    %139 = vector.broadcast %cst_67 : f32 to vector<8x128xf32>
    %140 = arith.addf %138, %139 : vector<8x128xf32>
    %141 = vector.extract_strided_slice %140 {offsets = [0, 0], sizes = [8, 32], strides = [1, 1]} : vector<8x128xf32> to vector<8x32xf32>
    %142 = vector.extract_strided_slice %140 {offsets = [0, 32], sizes = [8, 32], strides = [1, 1]} : vector<8x128xf32> to vector<8x32xf32>
    %143 = vector.extract_strided_slice %140 {offsets = [0, 64], sizes = [8, 32], strides = [1, 1]} : vector<8x128xf32> to vector<8x32xf32>
    %144 = vector.extract_strided_slice %136 {offsets = [0, 96], sizes = [8, 32], strides = [1, 1]} : vector<8x128xf32> to vector<8x32xf32>
    %145 = arith.mulf %142, %99 : vector<8x32xf32>
    %146 = arith.mulf %141, %144 : vector<8x32xf32>
    %147 = arith.addf %145, %146 : vector<8x32xf32>
    %148 = math.tanh %147 : vector<8x32xf32>
    %149 = arith.mulf %143, %148 : vector<8x32xf32>
    %150 = arith.addf %127, %18 : vector<8x128xf32>
    %151 = arith.truncf %149 : vector<8x32xf32> to vector<8x32xbf16>
    %cst_68 = arith.constant dense<0.000000e+00> : vector<8x128xf32>
    %152 = tpu.matmul %151, %13, %cst_68 {dimension_numbers = #tpu.dot_dimension_numbers<[1], [0], [0], [1], [0, 0, 1, 1], [], []>} : vector<8x32xbf16>, vector<32x128xbf16>, vector<8x128xf32> -> vector<8x128xf32>
    %153 = arith.addf %150, %152 : vector<8x128xf32>
    %154 = math.tanh %153 : vector<8x128xf32>
    %cst_69 = arith.constant 5.000000e-01 : f32
    %155 = vector.broadcast %cst_69 : f32 to vector<8x128xf32>
    %156 = arith.mulf %154, %155 : vector<8x128xf32>
    %cst_70 = arith.constant 5.000000e-01 : f32
    %157 = vector.broadcast %cst_70 : f32 to vector<8x128xf32>
    %158 = arith.addf %156, %157 : vector<8x128xf32>
    %159 = vector.extract_strided_slice %158 {offsets = [0, 0], sizes = [8, 32], strides = [1, 1]} : vector<8x128xf32> to vector<8x32xf32>
    %160 = vector.extract_strided_slice %158 {offsets = [0, 32], sizes = [8, 32], strides = [1, 1]} : vector<8x128xf32> to vector<8x32xf32>
    %161 = vector.extract_strided_slice %158 {offsets = [0, 64], sizes = [8, 32], strides = [1, 1]} : vector<8x128xf32> to vector<8x32xf32>
    %162 = vector.extract_strided_slice %154 {offsets = [0, 96], sizes = [8, 32], strides = [1, 1]} : vector<8x128xf32> to vector<8x32xf32>
    %163 = arith.mulf %160, %117 : vector<8x32xf32>
    %164 = arith.mulf %159, %162 : vector<8x32xf32>
    %165 = arith.addf %163, %164 : vector<8x32xf32>
    %166 = math.tanh %165 : vector<8x32xf32>
    %167 = arith.mulf %161, %166 : vector<8x32xf32>
    %cst_71 = arith.constant dense<0.000000e+00> : vector<8x128xf32>
    %168 = tpu.matmul %167, %15, %cst_71 {dimension_numbers = #tpu.dot_dimension_numbers<[1], [0], [0], [1], [0, 0, 1, 1], [], []>} : vector<8x32xf32>, vector<32x128xf32>, vector<8x128xf32> -> vector<8x128xf32>
    %169 = arith.addf %168, %21 : vector<8x128xf32>
    %170 = arith.index_cast %c3_i32 : i32 to index
    %c0_72 = arith.constant 0 : index
    %c0_73 = arith.constant 0 : index
    %171 = vector.load %arg13[%170, %c0_72, %c0_73] : memref<6x8x128xf32, #tpu.memory_space<vmem>>, vector<1x8x128xf32>
    %172 = vector.shape_cast %171 : vector<1x8x128xf32> to vector<8x128xf32>
    %173 = vector.shape_cast %169 : vector<8x128xf32> to vector<1x8x128xf32>
    tpu.vector_store %arg13[%170, %c0_72, %c0_73], %173 {strides = array<i32>} : memref<6x8x128xf32, #tpu.memory_space<vmem>>, vector<1x8x128xf32>,
    %c4_i32 = arith.constant 4 : i32
    %174 = arith.truncf %167 : vector<8x32xf32> to vector<8x32xbf16>
    %cst_74 = arith.constant dense<0.000000e+00> : vector<8x128xf32>
    %175 = tpu.matmul %174, %14, %cst_74 {dimension_numbers = #tpu.dot_dimension_numbers<[1], [0], [0], [1], [0, 0, 1, 1], [], []>} : vector<8x32xbf16>, vector<32x128xbf16>, vector<8x128xf32> -> vector<8x128xf32>
    %c1_i32_75 = arith.constant 1 : i32
    %176 = arith.subi %c4_i32, %c1_i32_75 : i32
    %c8_i32_76 = arith.constant 8 : i32
    %177 = arith.muli %176, %c8_i32_76 : i32
    %178 = tpu.assume_multiple %177, 8 : i32
    %179 = arith.index_cast %178 : i32 to index
    %c0_77 = arith.constant 0 : index
    %180 = vector.load %arg14[%179, %c0_77] : memref<40x128xf32, #tpu.memory_space<vmem>>, vector<8x128xf32>
    %181 = arith.truncf %149 : vector<8x32xf32> to vector<8x32xbf16>
    %cst_78 = arith.constant dense<0.000000e+00> : vector<8x128xf32>
    %182 = tpu.matmul %181, %12, %cst_78 {dimension_numbers = #tpu.dot_dimension_numbers<[1], [0], [0], [1], [0, 0, 1, 1], [], []>} : vector<8x32xbf16>, vector<32x128xbf16>, vector<8x128xf32> -> vector<8x128xf32>
    %183 = arith.addf %180, %182 : vector<8x128xf32>
    %184 = math.tanh %183 : vector<8x128xf32>
    %cst_79 = arith.constant 5.000000e-01 : f32
    %185 = vector.broadcast %cst_79 : f32 to vector<8x128xf32>
    %186 = arith.mulf %184, %185 : vector<8x128xf32>
    %cst_80 = arith.constant 5.000000e-01 : f32
    %187 = vector.broadcast %cst_80 : f32 to vector<8x128xf32>
    %188 = arith.addf %186, %187 : vector<8x128xf32>
    %189 = vector.extract_strided_slice %188 {offsets = [0, 0], sizes = [8, 32], strides = [1, 1]} : vector<8x128xf32> to vector<8x32xf32>
    %190 = vector.extract_strided_slice %188 {offsets = [0, 32], sizes = [8, 32], strides = [1, 1]} : vector<8x128xf32> to vector<8x32xf32>
    %191 = vector.extract_strided_slice %188 {offsets = [0, 64], sizes = [8, 32], strides = [1, 1]} : vector<8x128xf32> to vector<8x32xf32>
    %192 = vector.extract_strided_slice %184 {offsets = [0, 96], sizes = [8, 32], strides = [1, 1]} : vector<8x128xf32> to vector<8x32xf32>
    %193 = arith.mulf %190, %147 : vector<8x32xf32>
    %194 = arith.mulf %189, %192 : vector<8x32xf32>
    %195 = arith.addf %193, %194 : vector<8x32xf32>
    %196 = math.tanh %195 : vector<8x32xf32>
    %197 = arith.mulf %191, %196 : vector<8x32xf32>
    %198 = arith.addf %175, %18 : vector<8x128xf32>
    %199 = arith.truncf %197 : vector<8x32xf32> to vector<8x32xbf16>
    %cst_81 = arith.constant dense<0.000000e+00> : vector<8x128xf32>
    %200 = tpu.matmul %199, %13, %cst_81 {dimension_numbers = #tpu.dot_dimension_numbers<[1], [0], [0], [1], [0, 0, 1, 1], [], []>} : vector<8x32xbf16>, vector<32x128xbf16>, vector<8x128xf32> -> vector<8x128xf32>
    %201 = arith.addf %198, %200 : vector<8x128xf32>
    %202 = math.tanh %201 : vector<8x128xf32>
    %cst_82 = arith.constant 5.000000e-01 : f32
    %203 = vector.broadcast %cst_82 : f32 to vector<8x128xf32>
    %204 = arith.mulf %202, %203 : vector<8x128xf32>
    %cst_83 = arith.constant 5.000000e-01 : f32
    %205 = vector.broadcast %cst_83 : f32 to vector<8x128xf32>
    %206 = arith.addf %204, %205 : vector<8x128xf32>
    %207 = vector.extract_strided_slice %206 {offsets = [0, 0], sizes = [8, 32], strides = [1, 1]} : vector<8x128xf32> to vector<8x32xf32>
    %208 = vector.extract_strided_slice %206 {offsets = [0, 32], sizes = [8, 32], strides = [1, 1]} : vector<8x128xf32> to vector<8x32xf32>
    %209 = vector.extract_strided_slice %206 {offsets = [0, 64], sizes = [8, 32], strides = [1, 1]} : vector<8x128xf32> to vector<8x32xf32>
    %210 = vector.extract_strided_slice %202 {offsets = [0, 96], sizes = [8, 32], strides = [1, 1]} : vector<8x128xf32> to vector<8x32xf32>
    %211 = arith.mulf %208, %165 : vector<8x32xf32>
    %212 = arith.mulf %207, %210 : vector<8x32xf32>
    %213 = arith.addf %211, %212 : vector<8x32xf32>
    %214 = math.tanh %213 : vector<8x32xf32>
    %215 = arith.mulf %209, %214 : vector<8x32xf32>
    %cst_84 = arith.constant dense<0.000000e+00> : vector<8x128xf32>
    %216 = tpu.matmul %215, %15, %cst_84 {dimension_numbers = #tpu.dot_dimension_numbers<[1], [0], [0], [1], [0, 0, 1, 1], [], []>} : vector<8x32xf32>, vector<32x128xf32>, vector<8x128xf32> -> vector<8x128xf32>
    %217 = arith.addf %216, %21 : vector<8x128xf32>
    %218 = arith.index_cast %c4_i32 : i32 to index
    %c0_85 = arith.constant 0 : index
    %c0_86 = arith.constant 0 : index
    %219 = vector.load %arg13[%218, %c0_85, %c0_86] : memref<6x8x128xf32, #tpu.memory_space<vmem>>, vector<1x8x128xf32>
    %220 = vector.shape_cast %219 : vector<1x8x128xf32> to vector<8x128xf32>
    %221 = vector.shape_cast %217 : vector<8x128xf32> to vector<1x8x128xf32>
    tpu.vector_store %arg13[%218, %c0_85, %c0_86], %221 {strides = array<i32>} : memref<6x8x128xf32, #tpu.memory_space<vmem>>, vector<1x8x128xf32>,
    %c5_i32 = arith.constant 5 : i32
    %222 = arith.truncf %215 : vector<8x32xf32> to vector<8x32xbf16>
    %cst_87 = arith.constant dense<0.000000e+00> : vector<8x128xf32>
    %223 = tpu.matmul %222, %14, %cst_87 {dimension_numbers = #tpu.dot_dimension_numbers<[1], [0], [0], [1], [0, 0, 1, 1], [], []>} : vector<8x32xbf16>, vector<32x128xbf16>, vector<8x128xf32> -> vector<8x128xf32>
    %c1_i32_88 = arith.constant 1 : i32
    %224 = arith.subi %c5_i32, %c1_i32_88 : i32
    %c8_i32_89 = arith.constant 8 : i32
    %225 = arith.muli %224, %c8_i32_89 : i32
    %226 = tpu.assume_multiple %225, 8 : i32
    %227 = arith.index_cast %226 : i32 to index
    %c0_90 = arith.constant 0 : index
    %228 = vector.load %arg14[%227, %c0_90] : memref<40x128xf32, #tpu.memory_space<vmem>>, vector<8x128xf32>
    %229 = arith.truncf %197 : vector<8x32xf32> to vector<8x32xbf16>
    %cst_91 = arith.constant dense<0.000000e+00> : vector<8x128xf32>
    %230 = tpu.matmul %229, %12, %cst_91 {dimension_numbers = #tpu.dot_dimension_numbers<[1], [0], [0], [1], [0, 0, 1, 1], [], []>} : vector<8x32xbf16>, vector<32x128xbf16>, vector<8x128xf32> -> vector<8x128xf32>
    %231 = arith.addf %228, %230 : vector<8x128xf32>
    %232 = math.tanh %231 : vector<8x128xf32>
    %cst_92 = arith.constant 5.000000e-01 : f32
    %233 = vector.broadcast %cst_92 : f32 to vector<8x128xf32>
    %234 = arith.mulf %232, %233 : vector<8x128xf32>
    %cst_93 = arith.constant 5.000000e-01 : f32
    %235 = vector.broadcast %cst_93 : f32 to vector<8x128xf32>
    %236 = arith.addf %234, %235 : vector<8x128xf32>
    %237 = vector.extract_strided_slice %236 {offsets = [0, 0], sizes = [8, 32], strides = [1, 1]} : vector<8x128xf32> to vector<8x32xf32>
    %238 = vector.extract_strided_slice %236 {offsets = [0, 32], sizes = [8, 32], strides = [1, 1]} : vector<8x128xf32> to vector<8x32xf32>
    %239 = vector.extract_strided_slice %236 {offsets = [0, 64], sizes = [8, 32], strides = [1, 1]} : vector<8x128xf32> to vector<8x32xf32>
    %240 = vector.extract_strided_slice %232 {offsets = [0, 96], sizes = [8, 32], strides = [1, 1]} : vector<8x128xf32> to vector<8x32xf32>
    %241 = arith.mulf %238, %195 : vector<8x32xf32>
    %242 = arith.mulf %237, %240 : vector<8x32xf32>
    %243 = arith.addf %241, %242 : vector<8x32xf32>
    %244 = math.tanh %243 : vector<8x32xf32>
    %245 = arith.mulf %239, %244 : vector<8x32xf32>
    %246 = arith.addf %223, %18 : vector<8x128xf32>
    %247 = arith.truncf %245 : vector<8x32xf32> to vector<8x32xbf16>
    %cst_94 = arith.constant dense<0.000000e+00> : vector<8x128xf32>
    %248 = tpu.matmul %247, %13, %cst_94 {dimension_numbers = #tpu.dot_dimension_numbers<[1], [0], [0], [1], [0, 0, 1, 1], [], []>} : vector<8x32xbf16>, vector<32x128xbf16>, vector<8x128xf32> -> vector<8x128xf32>
    %249 = arith.addf %246, %248 : vector<8x128xf32>
    %250 = math.tanh %249 : vector<8x128xf32>
    %cst_95 = arith.constant 5.000000e-01 : f32
    %251 = vector.broadcast %cst_95 : f32 to vector<8x128xf32>
    %252 = arith.mulf %250, %251 : vector<8x128xf32>
    %cst_96 = arith.constant 5.000000e-01 : f32
    %253 = vector.broadcast %cst_96 : f32 to vector<8x128xf32>
    %254 = arith.addf %252, %253 : vector<8x128xf32>
    %255 = vector.extract_strided_slice %254 {offsets = [0, 0], sizes = [8, 32], strides = [1, 1]} : vector<8x128xf32> to vector<8x32xf32>
    %256 = vector.extract_strided_slice %254 {offsets = [0, 32], sizes = [8, 32], strides = [1, 1]} : vector<8x128xf32> to vector<8x32xf32>
    %257 = vector.extract_strided_slice %254 {offsets = [0, 64], sizes = [8, 32], strides = [1, 1]} : vector<8x128xf32> to vector<8x32xf32>
    %258 = vector.extract_strided_slice %250 {offsets = [0, 96], sizes = [8, 32], strides = [1, 1]} : vector<8x128xf32> to vector<8x32xf32>
    %259 = arith.mulf %256, %213 : vector<8x32xf32>
    %260 = arith.mulf %255, %258 : vector<8x32xf32>
    %261 = arith.addf %259, %260 : vector<8x32xf32>
    %262 = math.tanh %261 : vector<8x32xf32>
    %263 = arith.mulf %257, %262 : vector<8x32xf32>
    %cst_97 = arith.constant dense<0.000000e+00> : vector<8x128xf32>
    %264 = tpu.matmul %263, %15, %cst_97 {dimension_numbers = #tpu.dot_dimension_numbers<[1], [0], [0], [1], [0, 0, 1, 1], [], []>} : vector<8x32xf32>, vector<32x128xf32>, vector<8x128xf32> -> vector<8x128xf32>
    %265 = arith.addf %264, %21 : vector<8x128xf32>
    %266 = arith.index_cast %c5_i32 : i32 to index
    %c0_98 = arith.constant 0 : index
    %c0_99 = arith.constant 0 : index
    %267 = vector.load %arg13[%266, %c0_98, %c0_99] : memref<6x8x128xf32, #tpu.memory_space<vmem>>, vector<1x8x128xf32>
    %268 = vector.shape_cast %267 : vector<1x8x128xf32> to vector<8x128xf32>
    %269 = vector.shape_cast %265 : vector<8x128xf32> to vector<1x8x128xf32>
    tpu.vector_store %arg13[%266, %c0_98, %c0_99], %269 {strides = array<i32>} : memref<6x8x128xf32, #tpu.memory_space<vmem>>, vector<1x8x128xf32>,
    %c5_i32_100 = arith.constant 5 : i32
    return
  }
  func.func @transform_0(%arg0: i32) -> (i32, i32, i32) {
    %c0_i32 = arith.constant 0 : i32
    %c0_i32_0 = arith.constant 0 : i32
    %c0_i32_1 = arith.constant 0 : i32
    return %c0_i32, %arg0, %c0_i32_0 : i32, i32, i32
  }
  func.func @transform_1(%arg0: i32) -> (i32, i32) {
    %c0_i32 = arith.constant 0 : i32
    %c0_i32_0 = arith.constant 0 : i32
    return %arg0, %c0_i32 : i32, i32
  }
  func.func @transform_2(%arg0: i32) -> (i32, i32, i32) {
    %c0_i32 = arith.constant 0 : i32
    %c0_i32_0 = arith.constant 0 : i32
    %c0_i32_1 = arith.constant 0 : i32
    return %c0_i32, %arg0, %c0_i32_0 : i32, i32, i32
  }
  func.func @transform_3(%arg0: i32) -> (i32, i32, i32) {
    %c0_i32 = arith.constant 0 : i32
    %c0_i32_0 = arith.constant 0 : i32
    %c0_i32_1 = arith.constant 0 : i32
    return %c0_i32, %arg0, %c0_i32_0 : i32, i32, i32
  }
  func.func @transform_4(%arg0: i32) -> (i32, i32) {
    %c0_i32 = arith.constant 0 : i32
    %c0_i32_0 = arith.constant 0 : i32
    %c0_i32_1 = arith.constant 0 : i32
    return %c0_i32, %c0_i32_0 : i32, i32
  }
  func.func @transform_5(%arg0: i32) -> (i32, i32) {
    %c0_i32 = arith.constant 0 : i32
    %c0_i32_0 = arith.constant 0 : i32
    %c0_i32_1 = arith.constant 0 : i32
    return %c0_i32, %c0_i32_0 : i32, i32
  }
  func.func @transform_6(%arg0: i32) -> (i32, i32) {
    %c0_i32 = arith.constant 0 : i32
    %c0_i32_0 = arith.constant 0 : i32
    %c0_i32_1 = arith.constant 0 : i32
    return %c0_i32, %c0_i32_0 : i32, i32
  }
  func.func @transform_7(%arg0: i32) -> (i32, i32) {
    %c0_i32 = arith.constant 0 : i32
    %c0_i32_0 = arith.constant 0 : i32
    %c0_i32_1 = arith.constant 0 : i32
    return %c0_i32, %c0_i32_0 : i32, i32
  }
  func.func @transform_8(%arg0: i32) -> (i32, i32) {
    %c0_i32 = arith.constant 0 : i32
    %c0_i32_0 = arith.constant 0 : i32
    %c0_i32_1 = arith.constant 0 : i32
    return %c0_i32, %c0_i32_0 : i32, i32
  }
  func.func @transform_9(%arg0: i32) -> (i32, i32) {
    %c0_i32 = arith.constant 0 : i32
    %c0_i32_0 = arith.constant 0 : i32
    %c0_i32_1 = arith.constant 0 : i32
    return %c0_i32, %c0_i32_0 : i32, i32
  }
  func.func @transform_10(%arg0: i32) -> (i32, i32) {
    %c0_i32 = arith.constant 0 : i32
    %c0_i32_0 = arith.constant 0 : i32
    %c0_i32_1 = arith.constant 0 : i32
    return %c0_i32, %c0_i32_0 : i32, i32
  }
  func.func @transform_11(%arg0: i32) -> (i32, i32) {
    %c0_i32 = arith.constant 0 : i32
    %c0_i32_0 = arith.constant 0 : i32
    %c0_i32_1 = arith.constant 0 : i32
    return %c0_i32, %c0_i32_0 : i32, i32
  }
  func.func @transform_12(%arg0: i32) -> (i32, i32, i32) {
    %c0_i32 = arith.constant 0 : i32
    %c0_i32_0 = arith.constant 0 : i32
    %c0_i32_1 = arith.constant 0 : i32
    return %c0_i32, %arg0, %c0_i32_0 : i32, i32, i32
  }
}

</mosaic_0001>

<llo_original>
// kernel: tpu_custom_call.1
$region0: #{tpu_custom_call.1}
  #allocation0 [shape = 'u32[]', space=smem, size = 0x4, offset = 0x4, fixed_abs, tag = 'smem constant byte address 0x4 - core index']
  #allocation1 [shape = 'u32[72,128]{1,0:T(1,128)}', space=vmem, size = 0x9000, scoped, tag = 'internal scratch']
  #allocation2 [shape = 'f32[40,128]{1,0:T(8,128)}', space=vmem, size = 0x5000, scoped, tag = 'scratch operand']
  %s0 = inlined_call_operand.hbm [shape: f32[5,8,8], index: 0, kind: input, shape index: {}]
  %s1 = inlined_call_operand.hbm [shape: f32[8,128], index: 1, kind: input, shape index: {}]
  %s2 = inlined_call_operand.hbm [shape: f32[2,8,32], index: 2, kind: input, shape index: {}]
  %s3 = inlined_call_operand.hbm [shape: f32[2,8,32], index: 3, kind: input, shape index: {}]
  %s4 = inlined_call_operand.hbm [shape: f32[8,128], index: 4, kind: input, shape index: {}]
  %s5 = inlined_call_operand.vmem [shape: f32[1,128], index: 5, kind: input, shape index: {}]
  %s6 = inlined_call_operand.hbm [shape: bf16[32,128], index: 6, kind: input, shape index: {}]
  %s7 = inlined_call_operand.hbm [shape: bf16[32,128], index: 7, kind: input, shape index: {}]
  %s8 = inlined_call_operand.hbm [shape: bf16[32,128], index: 8, kind: input, shape index: {}]
  %s9 = inlined_call_operand.vmem [shape: f32[1,128], index: 9, kind: input, shape index: {}]
  %s10 = inlined_call_operand.hbm [shape: f32[32,128], index: 10, kind: input, shape index: {}]
  %s11 = inlined_call_operand.vmem [shape: f32[1,128], index: 11, kind: input, shape index: {}]
  %s12 = inlined_call_operand.hbm [shape: f32[6,8,128], index: 12, kind: output, shape index: {}]
  %s13 = sld [smem:[#allocation0]]
  $region94: #{tpu_custom_call.1} parent=0
    _
  %s15 = ssub.s32 1, %s13
  %s16 = scalar_select 0, %s15, %s13
  $region1: #{tpu_custom_call.1} parent=0
    #allocation3 [shape = 'u8[20480]{0}', space=vmem, size = 0x5000, scoped, tag = 'input window, operand 0, single buffered']
    #allocation4 [shape = 's32[1]{0}', space=sflag, size = 0x4, scoped, tag = 'scoped memory for tpu_custom_call.1']
    #allocation5 [shape = 's32[1]{0}', space=sflag, size = 0x4, scoped, tag = 'scoped memory for tpu_custom_call.1']
    #allocation6 [shape = 'u8[4096]{0}', space=vmem, size = 0x1000, scoped, tag = 'input window, operand 1, single buffered']
    #allocation7 [shape = 's32[1]{0}', space=sflag, size = 0x4, scoped, tag = 'scoped memory for tpu_custom_call.1']
    #allocation8 [shape = 'u8[8192]{0}', space=vmem, size = 0x2000, scoped, tag = 'input window, operand 2, single buffered']
    #allocation9 [shape = 'u8[8192]{0}', space=vmem, size = 0x2000, scoped, tag = 'input window, operand 3, single buffered']
    #allocation10 [shape = 's32[1]{0}', space=sflag, size = 0x4, scoped, tag = 'scoped memory for tpu_custom_call.1']
    #allocation11 [shape = 'u8[4096]{0}', space=vmem, size = 0x1000, scoped, tag = 'input window, operand 4, single buffered']
    #allocation12 [shape = 'u8[8192]{0}', space=vmem, size = 0x2000, scoped, tag = 'input window, operand 6, single buffered']
    #allocation13 [shape = 's32[1]{0}', space=sflag, size = 0x4, scoped, tag = 'scoped memory for tpu_custom_call.1']
    #allocation14 [shape = 'u8[8192]{0}', space=vmem, size = 0x2000, scoped, tag = 'input window, operand 7, single buffered']
    #allocation15 [shape = 'u8[8192]{0}', space=vmem, size = 0x2000, scoped, tag = 'input window, operand 8, single buffered']
    #allocation16 [shape = 's32[1]{0}', space=sflag, size = 0x4, scoped, tag = 'scoped memory for tpu_custom_call.1']
    #allocation17 [shape = 'u8[16384]{0}', space=vmem, size = 0x4000, scoped, tag = 'input window, operand 10, single buffered']
    #allocation18 [shape = 'u8[24576]{0}', space=vmem, size = 0x6000, scoped, tag = 'output window, operand 0, single buffered']
    %17 = vsyncpa [#allocation4], 0
    %18 = vsyncpa [#allocation7], 0
    %19 = vsyncpa [#allocation10], 0
    %20 = vsyncpa [#allocation13], 0
    %21 = vsyncpa [#allocation16], 0
    %22 = vsyncpa [#allocation5], 0
    // Predicated region
    $region2: #{tpu_custom_call.1} parent=1 // pred_check
      _
    $region3: #{tpu_custom_call.1} parent=1 // pred_check_branch
      %24 = sbr.rel (0) target = $region5
    $region4: #{tpu_custom_call.1} parent=1 // pred_region
      %26 = vsyncadd [#allocation4], 0
      %s27 = sshll.u32 %s0, 4
      %s28 = int_to_ptr.hbm [resolvable:$true] %s27
      %s29 = sshll.u32 [#allocation3], 4
      %s30 = int_to_ptr.vmem [resolvable:$true] %s29
      %35 = dma.hbm_to_vmem [thread:$0]  %s28, 640, %s30, [#allocation4], 128, 128, 8
    $region5: #{tpu_custom_call.1} parent=1 // pred_fallthru
      _
    // Predicated region
    $region6: #{tpu_custom_call.1} parent=1 // pred_check
      _
    $region7: #{tpu_custom_call.1} parent=1 // pred_check_branch
      %37 = sbr.rel (0) target = $region9
    $region8: #{tpu_custom_call.1} parent=1 // pred_region
      %39 = vsyncadd [#allocation7], 0
      %s41 = sshll.u32 %s1, 4
      %s42 = int_to_ptr.hbm [resolvable:$true] %s41
      %s43 = sshll.u32 [#allocation6], 4
      %s44 = int_to_ptr.vmem [resolvable:$true] %s43
      %46 = dma.hbm_to_vmem [thread:$0]  %s42, 128, %s44, [#allocation7]
    $region9: #{tpu_custom_call.1} parent=1 // pred_fallthru
      _
    // Predicated region
    $region10: #{tpu_custom_call.1} parent=1 // pred_check
      _
    $region11: #{tpu_custom_call.1} parent=1 // pred_check_branch
      %48 = sbr.rel (0) target = $region13
    $region12: #{tpu_custom_call.1} parent=1 // pred_region
      %50 = vsyncadd [#allocation7], 0
      %s51 = sshll.u32 %s2, 4
      %s52 = int_to_ptr.hbm [resolvable:$true] %s51
      %s53 = sshll.u32 [#allocation8], 4
      %s54 = int_to_ptr.vmem [resolvable:$true] %s53
      %59 = dma.hbm_to_vmem [thread:$0]  %s52, 256, %s54, [#allocation7], 128, 128, 8
    $region13: #{tpu_custom_call.1} parent=1 // pred_fallthru
      _
    // Predicated region
    $region14: #{tpu_custom_call.1} parent=1 // pred_check
      _
    $region15: #{tpu_custom_call.1} parent=1 // pred_check_branch
      %61 = sbr.rel (0) target = $region17
    $region16: #{tpu_custom_call.1} parent=1 // pred_region
      %63 = vsyncadd [#allocation10], 0
      %s64 = sshll.u32 %s3, 4
      %s65 = int_to_ptr.hbm [resolvable:$true] %s64
      %s66 = sshll.u32 [#allocation9], 4
      %s67 = int_to_ptr.vmem [resolvable:$true] %s66
      %72 = dma.hbm_to_vmem [thread:$0]  %s65, 256, %s67, [#allocation10], 128, 128, 8
    $region17: #{tpu_custom_call.1} parent=1 // pred_fallthru
      _
    // Predicated region
    $region18: #{tpu_custom_call.1} parent=1 // pred_check
      _
    $region19: #{tpu_custom_call.1} parent=1 // pred_check_branch
      %74 = sbr.rel (0) target = $region21
    $region20: #{tpu_custom_call.1} parent=1 // pred_region
      %76 = vsyncadd [#allocation10], 0
      %s78 = sshll.u32 %s4, 4
      %s79 = int_to_ptr.hbm [resolvable:$true] %s78
      %s80 = sshll.u32 [#allocation11], 4
      %s81 = int_to_ptr.vmem [resolvable:$true] %s80
      %83 = dma.hbm_to_vmem [thread:$0]  %s79, 128, %s81, [#allocation10]
    $region21: #{tpu_custom_call.1} parent=1 // pred_fallthru
      _
    // Predicated region
    $region22: #{tpu_custom_call.1} parent=1 // pred_check
      _
    $region23: #{tpu_custom_call.1} parent=1 // pred_check_branch
      %85 = sbr.rel (0) target = $region25
    $region24: #{tpu_custom_call.1} parent=1 // pred_region
      _
    $region25: #{tpu_custom_call.1} parent=1 // pred_fallthru
      _
    // Predicated region
    $region26: #{tpu_custom_call.1} parent=1 // pred_check
      _
    $region27: #{tpu_custom_call.1} parent=1 // pred_check_branch
      %87 = sbr.rel (0) target = $region29
    $region28: #{tpu_custom_call.1} parent=1 // pred_region
      %89 = vsyncadd [#allocation13], 0
      %s90 = sshll.u32 %s6, 4
      %s91 = int_to_ptr.hbm [resolvable:$true] %s90
      %s92 = sshll.u32 [#allocation12], 4
      %s93 = int_to_ptr.vmem [resolvable:$true] %s92
      %98 = dma.hbm_to_vmem [thread:$0]  %s91, 256, %s93, [#allocation13], 64, 64, 4
    $region29: #{tpu_custom_call.1} parent=1 // pred_fallthru
      _
    // Predicated region
    $region30: #{tpu_custom_call.1} parent=1 // pred_check
      _
    $region31: #{tpu_custom_call.1} parent=1 // pred_check_branch
      %100 = sbr.rel (0) target = $region33
    $region32: #{tpu_custom_call.1} parent=1 // pred_region
      %102 = vsyncadd [#allocation13], 0
      %s103 = sshll.u32 %s7, 4
      %s104 = int_to_ptr.hbm [resolvable:$true] %s103
      %s105 = sshll.u32 [#allocation14], 4
      %s106 = int_to_ptr.vmem [resolvable:$true] %s105
      %111 = dma.hbm_to_vmem [thread:$0]  %s104, 256, %s106, [#allocation13], 64, 64, 4
    $region33: #{tpu_custom_call.1} parent=1 // pred_fallthru
      _
    // Predicated region
    $region34: #{tpu_custom_call.1} parent=1 // pred_check
      _
    $region35: #{tpu_custom_call.1} parent=1 // pred_check_branch
      %113 = sbr.rel (0) target = $region37
    $region36: #{tpu_custom_call.1} parent=1 // pred_region
      %115 = vsyncadd [#allocation16], 0
      %s116 = sshll.u32 %s8, 4
      %s117 = int_to_ptr.hbm [resolvable:$true] %s116
      %s118 = sshll.u32 [#allocation15], 4
      %s119 = int_to_ptr.vmem [resolvable:$true] %s118
      %124 = dma.hbm_to_vmem [thread:$0]  %s117, 256, %s119, [#allocation16], 64, 64, 4
    $region37: #{tpu_custom_call.1} parent=1 // pred_fallthru
      _
    // Predicated region
    $region38: #{tpu_custom_call.1} parent=1 // pred_check
      _
    $region39: #{tpu_custom_call.1} parent=1 // pred_check_branch
      %126 = sbr.rel (0) target = $region41
    $region40: #{tpu_custom_call.1} parent=1 // pred_region
      _
    $region41: #{tpu_custom_call.1} parent=1 // pred_fallthru
      _
    // Predicated region
    $region42: #{tpu_custom_call.1} parent=1 // pred_check
      _
    $region43: #{tpu_custom_call.1} parent=1 // pred_check_branch
      %128 = sbr.rel (0) target = $region45
    $region44: #{tpu_custom_call.1} parent=1 // pred_region
      %130 = vsyncadd [#allocation16], 0
      %s131 = sshll.u32 %s10, 4
      %s132 = int_to_ptr.hbm [resolvable:$true] %s131
      %s133 = sshll.u32 [#allocation17], 4
      %s134 = int_to_ptr.vmem [resolvable:$true] %s133
      %139 = dma.hbm_to_vmem [thread:$0]  %s132, 512, %s134, [#allocation16], 128, 128, 8
    $region45: #{tpu_custom_call.1} parent=1 // pred_fallthru
      _
    // Predicated region
    $region46: #{tpu_custom_call.1} parent=1 // pred_check
      _
    $region47: #{tpu_custom_call.1} parent=1 // pred_check_branch
      %141 = sbr.rel (0) target = $region49
    $region48: #{tpu_custom_call.1} parent=1 // pred_region
      _
    $region49: #{tpu_custom_call.1} parent=1 // pred_fallthru
      _
    // Predicated region
    $region50: #{tpu_custom_call.1} parent=1 // pred_check
      _
    $region51: #{tpu_custom_call.1} parent=1 // pred_check_branch
      %143 = sbr.rel (0) target = $region53
    $region52: #{tpu_custom_call.1} parent=1 // pred_region
      %145 = dma.done [#allocation4], 640
    $region53: #{tpu_custom_call.1} parent=1 // pred_fallthru
      _
    // Predicated region
    $region54: #{tpu_custom_call.1} parent=1 // pred_check
      _
    $region55: #{tpu_custom_call.1} parent=1 // pred_check_branch
      %147 = sbr.rel (0) target = $region57
    $region56: #{tpu_custom_call.1} parent=1 // pred_region
      %149 = dma.done [#allocation7], 128
    $region57: #{tpu_custom_call.1} parent=1 // pred_fallthru
      _
    // Predicated region
    $region58: #{tpu_custom_call.1} parent=1 // pred_check
      _
    $region59: #{tpu_custom_call.1} parent=1 // pred_check_branch
      %151 = sbr.rel (0) target = $region61
    $region60: #{tpu_custom_call.1} parent=1 // pred_region
      %153 = dma.done [#allocation7], 256
    $region61: #{tpu_custom_call.1} parent=1 // pred_fallthru
      _
    // Predicated region
    $region62: #{tpu_custom_call.1} parent=1 // pred_check
      _
    $region63: #{tpu_custom_call.1} parent=1 // pred_check_branch
      %155 = sbr.rel (0) target = $region65
    $region64: #{tpu_custom_call.1} parent=1 // pred_region
      %157 = dma.done [#allocation10], 256
    $region65: #{tpu_custom_call.1} parent=1 // pred_fallthru
      _
    // Predicated region
    $region66: #{tpu_custom_call.1} parent=1 // pred_check
      _
    $region67: #{tpu_custom_call.1} parent=1 // pred_check_branch
      %159 = sbr.rel (0) target = $region69
    $region68: #{tpu_custom_call.1} parent=1 // pred_region
      %161 = dma.done [#allocation10], 128
    $region69: #{tpu_custom_call.1} parent=1 // pred_fallthru
      _
    // Predicated region
    $region70: #{tpu_custom_call.1} parent=1 // pred_check
      _
    $region71: #{tpu_custom_call.1} parent=1 // pred_check_branch
      %163 = sbr.rel (0) target = $region73
    $region72: #{tpu_custom_call.1} parent=1 // pred_region
      %165 = dma.done [#allocation13], 256
    $region73: #{tpu_custom_call.1} parent=1 // pred_fallthru
      _
    // Predicated region
    $region74: #{tpu_custom_call.1} parent=1 // pred_check
      _
    $region75: #{tpu_custom_call.1} parent=1 // pred_check_branch
      %167 = sbr.rel (0) target = $region77
    $region76: #{tpu_custom_call.1} parent=1 // pred_region
      %169 = dma.done [#allocation13], 256
    $region77: #{tpu_custom_call.1} parent=1 // pred_fallthru
      _
    // Predicated region
    $region78: #{tpu_custom_call.1} parent=1 // pred_check
      _
    $region79: #{tpu_custom_call.1} parent=1 // pred_check_branch
      %171 = sbr.rel (0) target = $region81
    $region80: #{tpu_custom_call.1} parent=1 // pred_region
      %173 = dma.done [#allocation16], 256
    $region81: #{tpu_custom_call.1} parent=1 // pred_fallthru
      _
    // Predicated region
    $region82: #{tpu_custom_call.1} parent=1 // pred_check
      _
    $region83: #{tpu_custom_call.1} parent=1 // pred_check_branch
      %175 = sbr.rel (0) target = $region85
    $region84: #{tpu_custom_call.1} parent=1 // pred_region
      %177 = dma.done [#allocation16], 512
    $region85: #{tpu_custom_call.1} parent=1 // pred_fallthru
      _
    %v179 = vld [vmem:[#allocation6] sm:$0xff]
    %180 = vst [vmem:[#allocation18] sm:$0xff] %v179
    %v181 = vld [vmem:[#allocation3] sm:$0xff]
    %v182 = vld [vmem:[#allocation3 + $0x8] sm:$0xff]
    %v183 = vld [vmem:[#allocation3 + $0x10] sm:$0xff]
    %v184 = vld [vmem:[#allocation3 + $0x18] sm:$0xff]
    %v185 = vld [vmem:[#allocation3 + $0x20] sm:$0xff]
    %v186 = vld [vmem:[#allocation11] sm:$0xff]
    %v187 = vld [vmem:[%s5] sm:$0x1]
    %v189 = vperm.slane %v187, 0
    %vm191 = vcmask 64512
    %v193 = vsel %vm191, %v181, 0
    %v196 = vsel %vm191, %v182, 0
    %v199 = vsel %vm191, %v183, 0
    %v202 = vsel %vm191, %v184, 0
    %v205 = vsel %vm191, %v185, 0
    %207 = vmatpush.msra.mxu0 0.0
    %208 = vmatpush.msra.mxu0 0.0
    %209 = vmatpush.msra.mxu0 0.0
    %210 = vmatpush.msra.mxu0 0.0
    %211 = vmatpush.msra.mxu0 0.0
    %212 = vmatpush.msra.mxu0 0.0
    %213 = vmatpush.msra.mxu0 0.0
    %214 = vmatpush.msra.mxu0 0.0
    %215 = vmatpush.msra.mxu0 0.0
    %216 = vmatpush.msra.mxu0 0.0
    %217 = vmatpush.msra.mxu0 0.0
    %218 = vmatpush.msra.mxu0 0.0
    %219 = vmatpush.msra.mxu0 0.0
    %220 = vmatpush.msra.mxu0 0.0
    %221 = vmatpush.msra.mxu0 0.0
    %222 = vmatpush.msra.mxu0 %v186
    %223 = vmatmul.f32.gmra.mxu0 %v193
    %v224 = vpop.f32.mrf.mxu0
    %v225 = vadd.f32 %v189, %v224
    %226 = vmatmul.f32.gmra.mxu0 %v196
    %v227 = vpop.f32.mrf.mxu0
    %v228 = vadd.f32 %v189, %v227
    %229 = vmatmul.f32.gmra.mxu0 %v199
    %v230 = vpop.f32.mrf.mxu0
    %v231 = vadd.f32 %v189, %v230
    %232 = vmatmul.f32.gmra.mxu0 %v202
    %v233 = vpop.f32.mrf.mxu0
    %v234 = vadd.f32 %v189, %v233
    %235 = vmatmul.f32.gmra.mxu0 %v205
    %v236 = vpop.f32.mrf.mxu0
    %v237 = vadd.f32 %v189, %v236
    %238 = vdwg.mxu0
    %239 = vst [vmem:[#allocation2] sm:$0xff] %v225
    %240 = vst [vmem:[#allocation2 + $0x8] sm:$0xff] %v228
    %241 = vst [vmem:[#allocation2 + $0x10] sm:$0xff] %v231
    %242 = vst [vmem:[#allocation2 + $0x18] sm:$0xff] %v234
    %243 = vst [vmem:[#allocation2 + $0x20] sm:$0xff] %v237
    %v244 = vld [vmem:[#allocation12] sm:$0xf]
    %v245 = vld [vmem:[#allocation12 + $0x4] sm:$0xf]
    %v246 = vld [vmem:[#allocation12 + $0x8] sm:$0xf]
    %v247 = vld [vmem:[#allocation12 + $0xc] sm:$0xf]
    %v248 = vld [vmem:[#allocation14] sm:$0xf]
    %v249 = vld [vmem:[#allocation14 + $0x4] sm:$0xf]
    %v250 = vld [vmem:[#allocation14 + $0x8] sm:$0xf]
    %v251 = vld [vmem:[#allocation14 + $0xc] sm:$0xf]
    %v252 = vld [vmem:[#allocation15] sm:$0xf]
    %v253 = vld [vmem:[#allocation15 + $0x4] sm:$0xf]
    %v254 = vld [vmem:[#allocation15 + $0x8] sm:$0xf]
    %v255 = vld [vmem:[#allocation15 + $0xc] sm:$0xf]
    %v256 = vld [vmem:[#allocation17] sm:$0xff]
    %v257 = vld [vmem:[#allocation17 + $0x8] sm:$0xff]
    %v258 = vld [vmem:[#allocation17 + $0x10] sm:$0xff]
    %v259 = vld [vmem:[#allocation17 + $0x18] sm:$0xff]
    %v260 = vld [vmem:[%s9] sm:$0x1]
    %v262 = vperm.slane %v260, 0
    %v264 = vld [vmem:[%s11] sm:$0x1]
    %v266 = vperm.slane %v264, 0
    %v268 = vld [vmem:[#allocation8] sm:$0xff]
    %v269 = vld [vmem:[#allocation9] sm:$0xff]
    %s270 = scalar_lea.vmem [#allocation8], 8
    %v271 = vld [vmem:[%s270] sm:$0xff]
    %s272 = scalar_lea.vmem [#allocation9], 8
    %v273 = vld [vmem:[%s272] sm:$0xff]
    %v274 = vpack.c.bf16 %v271, %v271
    %v275 = vld [vmem:[#allocation2] sm:$0xff]
    %v276 = vpack.c.bf16 %v268, %v268
    %v281 = vunpack.c.l.b16 %v244
    %v282 = vunpack.c.l.b16 %v245
    %v283 = vunpack.c.l.b16 %v246
    %v284 = vunpack.c.l.b16 %v247
    %v285 = vpack.c.b16 %v282, %v281
    %v286 = vpack.c.b16 %v284, %v283
    %vm289 = vcmask 261120
    %v291 = vsel %vm289, %v276, 0
    %293 = vmatpush.bf16.msra.mxu0 0
    %294 = vmatpush.bf16.msra.mxu0 0
    %295 = vmatpush.bf16.msra.mxu0 0
    %296 = vmatpush.bf16.msra.mxu0 0
    %297 = vmatpush.bf16.msra.mxu0 0
    %298 = vmatpush.bf16.msra.mxu0 0
    %299 = vmatpush.bf16.msra.mxu0 %v286
    %300 = vmatpush.bf16.msra.mxu0 %v285
    %301 = vmatmul.bf16.gmra.mxu0 %v291
    %v302 = vpop.f32.mrf.mxu0
    %v303 = vadd.f32 0.0, %v302
    %v304 = vpop.f32.mrf.mxu0
    %305 = vdwg.mxu0
    %v306 = vadd.f32 %v275, %v303
    %v307 = vtanh.pop %v306
    %v308 = vmul.f32 %v307, 0.5
    %v309 = vadd.f32 %v308, 0.5
    %311 = vrot.lane.b32.xlu0 %v269, 32
    %v312 = vpop.permute.xlu0 %311
    %v314 = vmul.f32 %v309, %v312
    %316 = vrot.lane.b32.xlu0 %v307, 32
    %v317 = vpop.permute.xlu0 %316
    %v319 = vmul.f32 %v309, %v317
    %321 = vrot.lane.b32.xlu0 %v319, 32
    %v322 = vpop.permute.xlu0 %321
    %v324 = vadd.f32 %v314, %v322
    %v325 = vtanh.pop %v324
    %327 = vrot.lane.b32.xlu0 %v325, 32
    %v328 = vpop.permute.xlu0 %327
    %v330 = vmul.f32 %v309, %v328
    %v335 = vunpack.c.l.b16 %v252
    %v336 = vunpack.c.l.b16 %v253
    %v337 = vunpack.c.l.b16 %v254
    %v338 = vunpack.c.l.b16 %v255
    %v339 = vpack.c.b16 %v336, %v335
    %v340 = vpack.c.b16 %v338, %v337
    %v344 = vsel %vm289, %v274, 0
    %346 = vmatpush.bf16.msra.mxu0 0
    %347 = vmatpush.bf16.msra.mxu0 0
    %348 = vmatpush.bf16.msra.mxu0 0
    %349 = vmatpush.bf16.msra.mxu0 0
    %350 = vmatpush.bf16.msra.mxu0 0
    %351 = vmatpush.bf16.msra.mxu0 0
    %352 = vmatpush.bf16.msra.mxu0 %v340
    %353 = vmatpush.bf16.msra.mxu0 %v339
    %354 = vmatmul.bf16.gmra.mxu0 %v344
    %v355 = vpop.f32.mrf.mxu0
    %v356 = vadd.f32 %v262, %v355
    %v357 = vpop.f32.mrf.mxu0
    %358 = vdwg.mxu0
    %v359 = vpack.c.bf16 %v330, %v330
    %361 = vrot.lane.b32.xlu0 %v359, 64
    %v362 = vpop.permute.xlu0 %361
    %v367 = vunpack.c.l.b16 %v248
    %v368 = vunpack.c.l.b16 %v249
    %v369 = vunpack.c.l.b16 %v250
    %v370 = vunpack.c.l.b16 %v251
    %v371 = vpack.c.b16 %v368, %v367
    %v372 = vpack.c.b16 %v370, %v369
    %v376 = vsel %vm289, %v362, 0
    %378 = vmatpush.bf16.msra.mxu0 0
    %379 = vmatpush.bf16.msra.mxu0 0
    %380 = vmatpush.bf16.msra.mxu0 0
    %381 = vmatpush.bf16.msra.mxu0 0
    %382 = vmatpush.bf16.msra.mxu0 0
    %383 = vmatpush.bf16.msra.mxu0 0
    %384 = vmatpush.bf16.msra.mxu0 %v372
    %385 = vmatpush.bf16.msra.mxu0 %v371
    %386 = vmatmul.bf16.gmra.mxu0 %v376
    %v387 = vpop.f32.mrf.mxu0
    %v388 = vadd.f32 0.0, %v387
    %v389 = vpop.f32.mrf.mxu0
    %390 = vdwg.mxu0
    %v391 = vadd.f32 %v356, %v388
    %v392 = vtanh.pop %v391
    %v393 = vmul.f32 %v392, 0.5
    %v394 = vadd.f32 %v393, 0.5
    %396 = vrot.lane.b32.xlu0 %v273, 32
    %v397 = vpop.permute.xlu0 %396
    %v399 = vmul.f32 %v394, %v397
    %401 = vrot.lane.b32.xlu0 %v392, 32
    %v402 = vpop.permute.xlu0 %401
    %v404 = vmul.f32 %v394, %v402
    %406 = vrot.lane.b32.xlu0 %v404, 32
    %v407 = vpop.permute.xlu0 %406
    %v409 = vadd.f32 %v399, %v407
    %v410 = vtanh.pop %v409
    %412 = vrot.lane.b32.xlu0 %v410, 32
    %v413 = vpop.permute.xlu0 %412
    %v415 = vmul.f32 %v394, %v413
    %417 = vrot.lane.b32.xlu0 %v415, 64
    %v418 = vpop.permute.xlu0 %417
    %v419 = vsel %vm289, %v418, 0
    %421 = vmatpush.msra.mxu0 0.0
    %422 = vmatpush.msra.mxu0 0.0
    %423 = vmatpush.msra.mxu0 0.0
    %424 = vmatpush.msra.mxu0 0.0
    %425 = vmatpush.msra.mxu0 0.0
    %426 = vmatpush.msra.mxu0 0.0
    %427 = vmatpush.msra.mxu0 0.0
    %428 = vmatpush.msra.mxu0 0.0
    %429 = vmatpush.msra.mxu0 0.0
    %430 = vmatpush.msra.mxu0 0.0
    %431 = vmatpush.msra.mxu0 0.0
    %432 = vmatpush.msra.mxu0 0.0
    %433 = vmatpush.msra.mxu0 %v259
    %434 = vmatpush.msra.mxu0 %v258
    %435 = vmatpush.msra.mxu0 %v257
    %436 = vmatpush.msra.mxu0 %v256
    %437 = vmatmul.f32.gmra.mxu0 %v419
    %v438 = vpop.f32.mrf.mxu0
    %v439 = vadd.f32 %v266, %v438
    %440 = vdwg.mxu0
    %s441 = scalar_lea.vmem [#allocation18], 8
    %442 = vst [vmem:[%s441] sm:$0xff] %v439
    %v443 = vpack.c.bf16 %v415, %v415
    %s444 = scalar_lea.vmem [#allocation2], 8
    %v445 = vld [vmem:[%s444] sm:$0xff]
    %446 = vmatpush.bf16.msra.mxu0 0
    %447 = vmatpush.bf16.msra.mxu0 0
    %448 = vmatpush.bf16.msra.mxu0 0
    %449 = vmatpush.bf16.msra.mxu0 0
    %450 = vmatpush.bf16.msra.mxu0 0
    %451 = vmatpush.bf16.msra.mxu0 0
    %452 = vmatpush.bf16.msra.mxu0 %v286
    %453 = vmatpush.bf16.msra.mxu0 %v285
    %454 = vmatmul.bf16.gmra.mxu0 %v376
    %v455 = vpop.f32.mrf.mxu0
    %v456 = vadd.f32 0.0, %v455
    %v457 = vpop.f32.mrf.mxu0
    %458 = vdwg.mxu0
    %v459 = vadd.f32 %v445, %v456
    %v460 = vtanh.pop %v459
    %v461 = vmul.f32 %v460, 0.5
    %v462 = vadd.f32 %v461, 0.5
    %v463 = vmul.f32 %v462, %v324
    %465 = vrot.lane.b32.xlu0 %v460, 32
    %v466 = vpop.permute.xlu0 %465
    %v468 = vmul.f32 %v462, %v466
    %470 = vrot.lane.b32.xlu0 %v468, 32
    %v471 = vpop.permute.xlu0 %470
    %v473 = vadd.f32 %v463, %v471
    %v474 = vtanh.pop %v473
    %476 = vrot.lane.b32.xlu0 %v474, 32
    %v477 = vpop.permute.xlu0 %476
    %v479 = vmul.f32 %v462, %v477
    %481 = vrot.lane.b32.xlu0 %v443, 64
    %v482 = vpop.permute.xlu0 %481
    %v484 = vsel %vm289, %v482, 0
    %486 = vmatpush.bf16.msra.mxu0 0
    %487 = vmatpush.bf16.msra.mxu0 0
    %488 = vmatpush.bf16.msra.mxu0 0
    %489 = vmatpush.bf16.msra.mxu0 0
    %490 = vmatpush.bf16.msra.mxu0 0
    %491 = vmatpush.bf16.msra.mxu0 0
    %492 = vmatpush.bf16.msra.mxu0 %v340
    %493 = vmatpush.bf16.msra.mxu0 %v339
    %494 = vmatmul.bf16.gmra.mxu0 %v484
    %v495 = vpop.f32.mrf.mxu0
    %v496 = vadd.f32 %v262, %v495
    %v497 = vpop.f32.mrf.mxu0
    %498 = vdwg.mxu0
    %v499 = vpack.c.bf16 %v479, %v479
    %501 = vrot.lane.b32.xlu0 %v499, 64
    %v502 = vpop.permute.xlu0 %501
    %v504 = vsel %vm289, %v502, 0
    %506 = vmatpush.bf16.msra.mxu0 0
    %507 = vmatpush.bf16.msra.mxu0 0
    %508 = vmatpush.bf16.msra.mxu0 0
    %509 = vmatpush.bf16.msra.mxu0 0
    %510 = vmatpush.bf16.msra.mxu0 0
    %511 = vmatpush.bf16.msra.mxu0 0
    %512 = vmatpush.bf16.msra.mxu0 %v372
    %513 = vmatpush.bf16.msra.mxu0 %v371
    %514 = vmatmul.bf16.gmra.mxu0 %v504
    %v515 = vpop.f32.mrf.mxu0
    %v516 = vadd.f32 0.0, %v515
    %v517 = vpop.f32.mrf.mxu0
    %518 = vdwg.mxu0
    %v519 = vadd.f32 %v496, %v516
    %v520 = vtanh.pop %v519
    %v521 = vmul.f32 %v520, 0.5
    %v522 = vadd.f32 %v521, 0.5
    %v523 = vmul.f32 %v522, %v409
    %525 = vrot.lane.b32.xlu0 %v520, 32
    %v526 = vpop.permute.xlu0 %525
    %v528 = vmul.f32 %v522, %v526
    %530 = vrot.lane.b32.xlu0 %v528, 32
    %v531 = vpop.permute.xlu0 %530
    %v533 = vadd.f32 %v523, %v531
    %v534 = vtanh.pop %v533
    %536 = vrot.lane.b32.xlu0 %v534, 32
    %v537 = vpop.permute.xlu0 %536
    %v539 = vmul.f32 %v522, %v537
    %541 = vrot.lane.b32.xlu0 %v539, 64
    %v542 = vpop.permute.xlu0 %541
    %v543 = vsel %vm289, %v542, 0
    %545 = vmatpush.msra.mxu0 0.0
    %546 = vmatpush.msra.mxu0 0.0
    %547 = vmatpush.msra.mxu0 0.0
    %548 = vmatpush.msra.mxu0 0.0
    %549 = vmatpush.msra.mxu0 0.0
    %550 = vmatpush.msra.mxu0 0.0
    %551 = vmatpush.msra.mxu0 0.0
    %552 = vmatpush.msra.mxu0 0.0
    %553 = vmatpush.msra.mxu0 0.0
    %554 = vmatpush.msra.mxu0 0.0
    %555 = vmatpush.msra.mxu0 0.0
    %556 = vmatpush.msra.mxu0 0.0
    %557 = vmatpush.msra.mxu0 %v259
    %558 = vmatpush.msra.mxu0 %v258
    %559 = vmatpush.msra.mxu0 %v257
    %560 = vmatpush.msra.mxu0 %v256
    %561 = vmatmul.f32.gmra.mxu0 %v543
    %v562 = vpop.f32.mrf.mxu0
    %v563 = vadd.f32 %v266, %v562
    %564 = vdwg.mxu0
    %s565 = scalar_lea.vmem [#allocation18], 16
    %566 = vst [vmem:[%s565] sm:$0xff] %v563
    %v567 = vpack.c.bf16 %v539, %v539
    %s568 = scalar_lea.vmem [#allocation2], 16
    %v569 = vld [vmem:[%s568] sm:$0xff]
    %570 = vmatpush.bf16.msra.mxu0 0
    %571 = vmatpush.bf16.msra.mxu0 0
    %572 = vmatpush.bf16.msra.mxu0 0
    %573 = vmatpush.bf16.msra.mxu0 0
    %574 = vmatpush.bf16.msra.mxu0 0
    %575 = vmatpush.bf16.msra.mxu0 0
    %576 = vmatpush.bf16.msra.mxu0 %v286
    %577 = vmatpush.bf16.msra.mxu0 %v285
    %578 = vmatmul.bf16.gmra.mxu0 %v504
    %v579 = vpop.f32.mrf.mxu0
    %v580 = vadd.f32 0.0, %v579
    %v581 = vpop.f32.mrf.mxu0
    %582 = vdwg.mxu0
    %v583 = vadd.f32 %v569, %v580
    %v584 = vtanh.pop %v583
    %v585 = vmul.f32 %v584, 0.5
    %v586 = vadd.f32 %v585, 0.5
    %v587 = vmul.f32 %v586, %v473
    %589 = vrot.lane.b32.xlu0 %v584, 32
    %v590 = vpop.permute.xlu0 %589
    %v592 = vmul.f32 %v586, %v590
    %594 = vrot.lane.b32.xlu0 %v592, 32
    %v595 = vpop.permute.xlu0 %594
    %v597 = vadd.f32 %v587, %v595
    %v598 = vtanh.pop %v597
    %600 = vrot.lane.b32.xlu0 %v598, 32
    %v601 = vpop.permute.xlu0 %600
    %v603 = vmul.f32 %v586, %v601
    %605 = vrot.lane.b32.xlu0 %v567, 64
    %v606 = vpop.permute.xlu0 %605
    %v608 = vsel %vm289, %v606, 0
    %610 = vmatpush.bf16.msra.mxu0 0
    %611 = vmatpush.bf16.msra.mxu0 0
    %612 = vmatpush.bf16.msra.mxu0 0
    %613 = vmatpush.bf16.msra.mxu0 0
    %614 = vmatpush.bf16.msra.mxu0 0
    %615 = vmatpush.bf16.msra.mxu0 0
    %616 = vmatpush.bf16.msra.mxu0 %v340
    %617 = vmatpush.bf16.msra.mxu0 %v339
    %618 = vmatmul.bf16.gmra.mxu0 %v608
    %v619 = vpop.f32.mrf.mxu0
    %v620 = vadd.f32 %v262, %v619
    %v621 = vpop.f32.mrf.mxu0
    %622 = vdwg.mxu0
    %v623 = vpack.c.bf16 %v603, %v603
    %625 = vrot.lane.b32.xlu0 %v623, 64
    %v626 = vpop.permute.xlu0 %625
    %v628 = vsel %vm289, %v626, 0
    %630 = vmatpush.bf16.msra.mxu0 0
    %631 = vmatpush.bf16.msra.mxu0 0
    %632 = vmatpush.bf16.msra.mxu0 0
    %633 = vmatpush.bf16.msra.mxu0 0
    %634 = vmatpush.bf16.msra.mxu0 0
    %635 = vmatpush.bf16.msra.mxu0 0
    %636 = vmatpush.bf16.msra.mxu0 %v372
    %637 = vmatpush.bf16.msra.mxu0 %v371
    %638 = vmatmul.bf16.gmra.mxu0 %v628
    %v639 = vpop.f32.mrf.mxu0
    %v640 = vadd.f32 0.0, %v639
    %v641 = vpop.f32.mrf.mxu0
    %642 = vdwg.mxu0
    %v643 = vadd.f32 %v620, %v640
    %v644 = vtanh.pop %v643
    %v645 = vmul.f32 %v644, 0.5
    %v646 = vadd.f32 %v645, 0.5
    %v647 = vmul.f32 %v646, %v533
    %649 = vrot.lane.b32.xlu0 %v644, 32
    %v650 = vpop.permute.xlu0 %649
    %v652 = vmul.f32 %v646, %v650
    %654 = vrot.lane.b32.xlu0 %v652, 32
    %v655 = vpop.permute.xlu0 %654
    %v657 = vadd.f32 %v647, %v655
    %v658 = vtanh.pop %v657
    %660 = vrot.lane.b32.xlu0 %v658, 32
    %v661 = vpop.permute.xlu0 %660
    %v663 = vmul.f32 %v646, %v661
    %665 = vrot.lane.b32.xlu0 %v663, 64
    %v666 = vpop.permute.xlu0 %665
    %v667 = vsel %vm289, %v666, 0
    %669 = vmatpush.msra.mxu0 0.0
    %670 = vmatpush.msra.mxu0 0.0
    %671 = vmatpush.msra.mxu0 0.0
    %672 = vmatpush.msra.mxu0 0.0
    %673 = vmatpush.msra.mxu0 0.0
    %674 = vmatpush.msra.mxu0 0.0
    %675 = vmatpush.msra.mxu0 0.0
    %676 = vmatpush.msra.mxu0 0.0
    %677 = vmatpush.msra.mxu0 0.0
    %678 = vmatpush.msra.mxu0 0.0
    %679 = vmatpush.msra.mxu0 0.0
    %680 = vmatpush.msra.mxu0 0.0
    %681 = vmatpush.msra.mxu0 %v259
    %682 = vmatpush.msra.mxu0 %v258
    %683 = vmatpush.msra.mxu0 %v257
    %684 = vmatpush.msra.mxu0 %v256
    %685 = vmatmul.f32.gmra.mxu0 %v667
    %v686 = vpop.f32.mrf.mxu0
    %v687 = vadd.f32 %v266, %v686
    %688 = vdwg.mxu0
    %s689 = scalar_lea.vmem [#allocation18], 24
    %690 = vst [vmem:[%s689] sm:$0xff] %v687
    %v691 = vpack.c.bf16 %v663, %v663
    %s692 = scalar_lea.vmem [#allocation2], 24
    %v693 = vld [vmem:[%s692] sm:$0xff]
    %694 = vmatpush.bf16.msra.mxu0 0
    %695 = vmatpush.bf16.msra.mxu0 0
    %696 = vmatpush.bf16.msra.mxu0 0
    %697 = vmatpush.bf16.msra.mxu0 0
    %698 = vmatpush.bf16.msra.mxu0 0
    %699 = vmatpush.bf16.msra.mxu0 0
    %700 = vmatpush.bf16.msra.mxu0 %v286
    %701 = vmatpush.bf16.msra.mxu0 %v285
    %702 = vmatmul.bf16.gmra.mxu0 %v628
    %v703 = vpop.f32.mrf.mxu0
    %v704 = vadd.f32 0.0, %v703
    %v705 = vpop.f32.mrf.mxu0
    %706 = vdwg.mxu0
    %v707 = vadd.f32 %v693, %v704
    %v708 = vtanh.pop %v707
    %v709 = vmul.f32 %v708, 0.5
    %v710 = vadd.f32 %v709, 0.5
    %v711 = vmul.f32 %v710, %v597
    %713 = vrot.lane.b32.xlu0 %v708, 32
    %v714 = vpop.permute.xlu0 %713
    %v716 = vmul.f32 %v710, %v714
    %718 = vrot.lane.b32.xlu0 %v716, 32
    %v719 = vpop.permute.xlu0 %718
    %v721 = vadd.f32 %v711, %v719
    %v722 = vtanh.pop %v721
    %724 = vrot.lane.b32.xlu0 %v722, 32
    %v725 = vpop.permute.xlu0 %724
    %v727 = vmul.f32 %v710, %v725
    %729 = vrot.lane.b32.xlu0 %v691, 64
    %v730 = vpop.permute.xlu0 %729
    %v732 = vsel %vm289, %v730, 0
    %734 = vmatpush.bf16.msra.mxu0 0
    %735 = vmatpush.bf16.msra.mxu0 0
    %736 = vmatpush.bf16.msra.mxu0 0
    %737 = vmatpush.bf16.msra.mxu0 0
    %738 = vmatpush.bf16.msra.mxu0 0
    %739 = vmatpush.bf16.msra.mxu0 0
    %740 = vmatpush.bf16.msra.mxu0 %v340
    %741 = vmatpush.bf16.msra.mxu0 %v339
    %742 = vmatmul.bf16.gmra.mxu0 %v732
    %v743 = vpop.f32.mrf.mxu0
    %v744 = vadd.f32 %v262, %v743
    %v745 = vpop.f32.mrf.mxu0
    %746 = vdwg.mxu0
    %v747 = vpack.c.bf16 %v727, %v727
    %749 = vrot.lane.b32.xlu0 %v747, 64
    %v750 = vpop.permute.xlu0 %749
    %v752 = vsel %vm289, %v750, 0
    %754 = vmatpush.bf16.msra.mxu0 0
    %755 = vmatpush.bf16.msra.mxu0 0
    %756 = vmatpush.bf16.msra.mxu0 0
    %757 = vmatpush.bf16.msra.mxu0 0
    %758 = vmatpush.bf16.msra.mxu0 0
    %759 = vmatpush.bf16.msra.mxu0 0
    %760 = vmatpush.bf16.msra.mxu0 %v372
    %761 = vmatpush.bf16.msra.mxu0 %v371
    %762 = vmatmul.bf16.gmra.mxu0 %v752
    %v763 = vpop.f32.mrf.mxu0
    %v764 = vadd.f32 0.0, %v763
    %v765 = vpop.f32.mrf.mxu0
    %766 = vdwg.mxu0
    %v767 = vadd.f32 %v744, %v764
    %v768 = vtanh.pop %v767
    %v769 = vmul.f32 %v768, 0.5
    %v770 = vadd.f32 %v769, 0.5
    %v771 = vmul.f32 %v770, %v657
    %773 = vrot.lane.b32.xlu0 %v768, 32
    %v774 = vpop.permute.xlu0 %773
    %v776 = vmul.f32 %v770, %v774
    %778 = vrot.lane.b32.xlu0 %v776, 32
    %v779 = vpop.permute.xlu0 %778
    %v781 = vadd.f32 %v771, %v779
    %v782 = vtanh.pop %v781
    %784 = vrot.lane.b32.xlu0 %v782, 32
    %v785 = vpop.permute.xlu0 %784
    %v787 = vmul.f32 %v770, %v785
    %789 = vrot.lane.b32.xlu0 %v787, 64
    %v790 = vpop.permute.xlu0 %789
    %v791 = vsel %vm289, %v790, 0
    %793 = vmatpush.msra.mxu0 0.0
    %794 = vmatpush.msra.mxu0 0.0
    %795 = vmatpush.msra.mxu0 0.0
    %796 = vmatpush.msra.mxu0 0.0
    %797 = vmatpush.msra.mxu0 0.0
    %798 = vmatpush.msra.mxu0 0.0
    %799 = vmatpush.msra.mxu0 0.0
    %800 = vmatpush.msra.mxu0 0.0
    %801 = vmatpush.msra.mxu0 0.0
    %802 = vmatpush.msra.mxu0 0.0
    %803 = vmatpush.msra.mxu0 0.0
    %804 = vmatpush.msra.mxu0 0.0
    %805 = vmatpush.msra.mxu0 %v259
    %806 = vmatpush.msra.mxu0 %v258
    %807 = vmatpush.msra.mxu0 %v257
    %808 = vmatpush.msra.mxu0 %v256
    %809 = vmatmul.f32.gmra.mxu0 %v791
    %v810 = vpop.f32.mrf.mxu0
    %v811 = vadd.f32 %v266, %v810
    %812 = vdwg.mxu0
    %s813 = scalar_lea.vmem [#allocation18], 32
    %814 = vst [vmem:[%s813] sm:$0xff] %v811
    %v815 = vpack.c.bf16 %v787, %v787
    %s816 = scalar_lea.vmem [#allocation2], 32
    %v817 = vld [vmem:[%s816] sm:$0xff]
    %818 = vmatpush.bf16.msra.mxu0 0
    %819 = vmatpush.bf16.msra.mxu0 0
    %820 = vmatpush.bf16.msra.mxu0 0
    %821 = vmatpush.bf16.msra.mxu0 0
    %822 = vmatpush.bf16.msra.mxu0 0
    %823 = vmatpush.bf16.msra.mxu0 0
    %824 = vmatpush.bf16.msra.mxu0 %v286
    %825 = vmatpush.bf16.msra.mxu0 %v285
    %826 = vmatmul.bf16.gmra.mxu0 %v752
    %v827 = vpop.f32.mrf.mxu0
    %v828 = vadd.f32 0.0, %v827
    %v829 = vpop.f32.mrf.mxu0
    %830 = vdwg.mxu0
    %v831 = vadd.f32 %v817, %v828
    %v832 = vtanh.pop %v831
    %v833 = vmul.f32 %v832, 0.5
    %v834 = vadd.f32 %v833, 0.5
    %v835 = vmul.f32 %v834, %v721
    %837 = vrot.lane.b32.xlu0 %v832, 32
    %v838 = vpop.permute.xlu0 %837
    %v840 = vmul.f32 %v834, %v838
    %842 = vrot.lane.b32.xlu0 %v840, 32
    %v843 = vpop.permute.xlu0 %842
    %v845 = vadd.f32 %v835, %v843
    %v846 = vtanh.pop %v845
    %848 = vrot.lane.b32.xlu0 %v846, 32
    %v849 = vpop.permute.xlu0 %848
    %v851 = vmul.f32 %v834, %v849
    %853 = vrot.lane.b32.xlu0 %v815, 64
    %v854 = vpop.permute.xlu0 %853
    %v856 = vsel %vm289, %v854, 0
    %858 = vmatpush.bf16.msra.mxu0 0
    %859 = vmatpush.bf16.msra.mxu0 0
    %860 = vmatpush.bf16.msra.mxu0 0
    %861 = vmatpush.bf16.msra.mxu0 0
    %862 = vmatpush.bf16.msra.mxu0 0
    %863 = vmatpush.bf16.msra.mxu0 0
    %864 = vmatpush.bf16.msra.mxu0 %v340
    %865 = vmatpush.bf16.msra.mxu0 %v339
    %866 = vmatmul.bf16.gmra.mxu0 %v856
    %v867 = vpop.f32.mrf.mxu0
    %v868 = vadd.f32 %v262, %v867
    %v869 = vpop.f32.mrf.mxu0
    %870 = vdwg.mxu0
    %v871 = vpack.c.bf16 %v851, %v851
    %873 = vrot.lane.b32.xlu0 %v871, 64
    %v874 = vpop.permute.xlu0 %873
    %v876 = vsel %vm289, %v874, 0
    %878 = vmatpush.bf16.msra.mxu0 0
    %879 = vmatpush.bf16.msra.mxu0 0
    %880 = vmatpush.bf16.msra.mxu0 0
    %881 = vmatpush.bf16.msra.mxu0 0
    %882 = vmatpush.bf16.msra.mxu0 0
    %883 = vmatpush.bf16.msra.mxu0 0
    %884 = vmatpush.bf16.msra.mxu0 %v372
    %885 = vmatpush.bf16.msra.mxu0 %v371
    %886 = vmatmul.bf16.gmra.mxu0 %v876
    %v887 = vpop.f32.mrf.mxu0
    %v888 = vadd.f32 0.0, %v887
    %v889 = vpop.f32.mrf.mxu0
    %890 = vdwg.mxu0
    %v891 = vadd.f32 %v868, %v888
    %v892 = vtanh.pop %v891
    %v893 = vmul.f32 %v892, 0.5
    %v894 = vadd.f32 %v893, 0.5
    %v895 = vmul.f32 %v894, %v781
    %897 = vrot.lane.b32.xlu0 %v892, 32
    %v898 = vpop.permute.xlu0 %897
    %v900 = vmul.f32 %v894, %v898
    %902 = vrot.lane.b32.xlu0 %v900, 32
    %v903 = vpop.permute.xlu0 %902
    %v905 = vadd.f32 %v895, %v903
    %v906 = vtanh.pop %v905
    %908 = vrot.lane.b32.xlu0 %v906, 32
    %v909 = vpop.permute.xlu0 %908
    %v911 = vmul.f32 %v894, %v909
    %913 = vrot.lane.b32.xlu0 %v911, 64
    %v914 = vpop.permute.xlu0 %913
    %v915 = vsel %vm289, %v914, 0
    %917 = vmatpush.msra.mxu0 0.0
    %918 = vmatpush.msra.mxu0 0.0
    %919 = vmatpush.msra.mxu0 0.0
    %920 = vmatpush.msra.mxu0 0.0
    %921 = vmatpush.msra.mxu0 0.0
    %922 = vmatpush.msra.mxu0 0.0
    %923 = vmatpush.msra.mxu0 0.0
    %924 = vmatpush.msra.mxu0 0.0
    %925 = vmatpush.msra.mxu0 0.0
    %926 = vmatpush.msra.mxu0 0.0
    %927 = vmatpush.msra.mxu0 0.0
    %928 = vmatpush.msra.mxu0 0.0
    %929 = vmatpush.msra.mxu0 %v259
    %930 = vmatpush.msra.mxu0 %v258
    %931 = vmatpush.msra.mxu0 %v257
    %932 = vmatpush.msra.mxu0 %v256
    %933 = vmatmul.f32.gmra.mxu0 %v915
    %v934 = vpop.f32.mrf.mxu0
    %v935 = vadd.f32 %v266, %v934
    %936 = vdwg.mxu0
    %s937 = scalar_lea.vmem [#allocation18], 40
    %938 = vst [vmem:[%s937] sm:$0xff] %v935
    // Predicated region
    $region86: #{tpu_custom_call.1} parent=1 // pred_check
      _
    $region87: #{tpu_custom_call.1} parent=1 // pred_check_branch
      %940 = sbr.rel (0) target = $region89
    $region88: #{tpu_custom_call.1} parent=1 // pred_region
      %942 = vsyncadd [#allocation5], 0
      %s943 = sshll.u32 [#allocation18], 4
      %s944 = int_to_ptr.vmem [resolvable:$true] %s943
      %s945 = sshll.u32 %s12, 4
      %s946 = int_to_ptr.hbm [resolvable:$true] %s945
      %951 = dma.vmem_to_hbm [thread:$0]  %s944, 768, %s946, [#allocation5], 128, 128, 8
    $region89: #{tpu_custom_call.1} parent=1 // pred_fallthru
      _
    // Predicated region
    $region90: #{tpu_custom_call.1} parent=1 // pred_check
      _
    $region91: #{tpu_custom_call.1} parent=1 // pred_check_branch
      %953 = sbr.rel (0) target = $region93
    $region92: #{tpu_custom_call.1} parent=1 // pred_region
      %955 = dma.done [#allocation5], 768
    $region93: #{tpu_custom_call.1} parent=1 // pred_fallthru
      _
    %956 = vsyncpa [#allocation4], 1
    %957 = vsyncpa [#allocation7], 1
    %958 = vsyncpa [#allocation10], 1
    %959 = vsyncpa [#allocation13], 1
    %960 = vsyncpa [#allocation16], 1
    %961 = vsyncpa [#allocation5], 1

</llo_original>
